<compile_context>
chip_gen: v7x
topology: tpu7x:2x2x1
jax: 0.10.0
libtpu: 0.0.40
codegen_flags: <defaults>
</compile_context>

<pallas_src>
import functools

import jax
import jax.numpy as jnp
from jax.experimental import pallas as pl
from jax.experimental.pallas import tpu as pltpu

# ----------------------- config (small, deterministic) -----------------------
D_NUM = 6                    # numerical features
CAT_CARDS = (3, 5)           # categorical cardinalities -> one-hot
D_CAT = sum(CAT_CARDS)
D_FLAT = D_NUM + D_CAT       # 14
K = 4                        # ensemble members (tabm-mini)
D_BLOCK = 32                 # backbone MLP hidden width
D_BB = 24                    # backbone output width (folded into the x-encoder weight)
D_MODEL = 128                # TabPFN stand-in model width (lane-dense)
D_FF = 256                   # TabPFN stand-in FFN width
N_CLASSES = 10               # TabPFN max_num_classes
N_CLASSES_PAD = 128          # lane-dense decoder/output width (sliced to :D_OUT outside)
D_OUT = 3                    # d_out


def _round_up(x, m):
    return (x + m - 1) // m * m


def _layernorm(x, eps=1e-5):
    # single-pass statistics (one sum + one sum-of-squares per row)
    n = x.shape[-1]
    s1 = jnp.sum(x, axis=-1, keepdims=True)
    s2 = jnp.sum(x * x, axis=-1, keepdims=True)
    mu = s1 * (1.0 / n)
    var = s2 * (1.0 / n) - mu * mu
    return (x - mu) * jax.lax.rsqrt(var + eps)


# ================ kernel 1: TabM front-end + encoders + fused qkv =============
def _frontend_kernel(feats_ref, y_ref, wens_ref, w1_ref, b1_ref, w2x_ref, b2x_ref,
                     wy_ref, by_ref, wqkv_ref,
                     h_ref, q_ref, k_ref, v_ref, *, eval_pos, t_seq):
    f32 = jnp.float32
    bf16 = jnp.bfloat16
    i = pl.program_id(0)

    # ElementwiseAffineEnsemble (random-signs weights), K folded into the row dim.
    x = feats_ref[...]                                        # (tS, D_FLAT) f32
    s = wens_ref[...]                                         # (K, D_FLAT)
    xs = (x[None, :, :] * s[:, None, :]).reshape(K * t_seq, D_FLAT)

    # shared MLP backbone (f32, like the reference) ...
    h1 = jnp.dot(xs, w1_ref[...], preferred_element_type=f32) + b1_ref[...]
    h1 = jnp.maximum(h1, 0.0)                                 # ReLU
    # ... with the backbone out-proj folded into the TabPFN x-encoder (bf16 head).
    z = jnp.dot(h1.astype(bf16), w2x_ref[...], preferred_element_type=f32) + b2x_ref[...]

    # y-encoding only on the training prefix (in-kernel iota mask, no mask DMA).
    pos = i * t_seq + jax.lax.broadcasted_iota(jnp.int32, (t_seq, 1), 0)
    ymask = (pos < eval_pos).astype(f32)                      # (tS, 1)
    yenc = (y_ref[...] * wy_ref[...] + by_ref[...]) * ymask   # (tS, D_MODEL)
    h = (z.reshape(K, t_seq, D_MODEL) + yenc[None]).reshape(K * t_seq, D_MODEL)

    # fused qkv projection; q/k/v bands are 128-lane aligned; softmax scale is
    # pre-folded into the q columns of wqkv.
    qkv = jnp.dot(h.astype(bf16), wqkv_ref[...], preferred_element_type=f32)

    h_ref[...] = h.reshape(K, t_seq, D_MODEL)
    q_ref[...] = qkv[:, :D_MODEL].reshape(K, t_seq, D_MODEL).astype(bf16)
    k_ref[...] = qkv[:, D_MODEL:2 * D_MODEL].reshape(K, t_seq, D_MODEL).astype(bf16)
    v_ref[...] = qkv[:, 2 * D_MODEL:].reshape(K, t_seq, D_MODEL).astype(bf16)


def _frontend_call(feats, y_full, p, *, eval_pos, t_seq):
    L_pad = feats.shape[0]
    n_tiles = L_pad // t_seq
    kern = functools.partial(_frontend_kernel, eval_pos=eval_pos, t_seq=t_seq)
    seq3 = pl.BlockSpec((K, t_seq, D_MODEL), lambda i: (0, i, 0))
    wsp = lambda shp: pl.BlockSpec(shp, lambda i: (0, 0))     # resident weights
    return pl.pallas_call(
        kern,
        out_shape=(
            jax.ShapeDtypeStruct((K, L_pad, D_MODEL), jnp.float32),   # h (residual)
            jax.ShapeDtypeStruct((K, L_pad, D_MODEL), jnp.bfloat16),  # q (scaled)
            jax.ShapeDtypeStruct((K, L_pad, D_MODEL), jnp.bfloat16),  # k
            jax.ShapeDtypeStruct((K, L_pad, D_MODEL), jnp.bfloat16),  # v
        ),
        grid=(n_tiles,),
        in_specs=[
            pl.BlockSpec((t_seq, D_FLAT), lambda i: (i, 0)),
            pl.BlockSpec((t_seq, 1), lambda i: (i, 0)),
            wsp((K, D_FLAT)),
            wsp((D_FLAT, D_BLOCK)), wsp((1, D_BLOCK)),
            wsp((D_BLOCK, D_MODEL)), wsp((1, D_MODEL)),
            wsp((1, D_MODEL)), wsp((1, D_MODEL)),
            wsp((D_MODEL, 3 * D_MODEL)),
        ],
        out_specs=(seq3, seq3, seq3, seq3),
        compiler_params=pltpu.CompilerParams(
            dimension_semantics=("parallel",),
            # per-step working set is ~6 MiB at t_seq=256 incl. double-buffering; 32 MiB
            # leaves headroom and stays well under v7x's 64 MiB physical VMEM.
            vmem_limit_bytes=32 * 1024 * 1024),
    )(feats, y_full, p['w_ens'], p['w1'], p['b1'], p['w2x'], p['b2x'],
      p['wy'], p['by'], p['wqkv'])


# ======== kernel 2: flash prefix-attention + FFN + decoder (query rows) =======
def _attn_head_kernel(q_ref, kp_ref, vp_ref, ks_ref, vs_ref, h_ref,
                      wo_ref, wf1_ref, bf1_ref, wf2_ref, bf2_ref, wdec_ref, bdec_ref,
                      o_ref, m_sc, l_sc, acc_sc, *, eval_pos, t_q, t_p):
    f32 = jnp.float32
    bf16 = jnp.bfloat16
    pi = pl.program_id(1)

    q = q_ref[...]                                            # (K, tQ, D) bf16, scale folded

    @pl.when(pi == 0)
    def _():
        # seed the online softmax with each query row's self-attention term
        # (same bf16 q/k operands as the MXU path, f32 accumulation).
        ks = ks_ref[...].astype(f32)
        self_logit = jnp.sum(q.astype(f32) * ks, axis=-1, keepdims=True)   # (K, tQ, 1)
        m_sc[...] = self_logit
        l_sc[...] = jnp.full_like(l_sc, 1.0)
        acc_sc[...] = vs_ref[...].astype(f32)

    # flash step over one prefix tile
    kp = kp_ref[...]                                          # (K, tP, D) bf16
    vp = vp_ref[...]
    scores = jax.lax.dot_general(
        q, kp, dimension_numbers=(((2,), (2,)), ((0,), (0,))),
        preferred_element_type=f32)                           # (K, tQ, tP)
    col = pi * t_p + jax.lax.broadcasted_iota(jnp.int32, (1, 1, t_p), 2)
    scores = jnp.where(col < eval_pos, scores, -1e30)         # mask padded prefix rows

    m_prev = m_sc[...]
    m_new = jnp.maximum(m_prev, jnp.max(scores, axis=-1, keepdims=True))
    alpha = jnp.exp(m_prev - m_new)
    p = jnp.exp(scores - m_new)                               # (K, tQ, tP) f32
    l_sc[...] = alpha * l_sc[...] + jnp.sum(p, axis=-1, keepdims=True)
    acc_sc[...] = alpha * acc_sc[...] + jax.lax.dot_general(
        p.astype(bf16), vp, dimension_numbers=(((2,), (1,)), ((0,), (0,))),
        preferred_element_type=f32)
    m_sc[...] = m_new

    @pl.when(pi == pl.num_programs(1) - 1)
    def _():
        ctx = acc_sc[...] * pl.reciprocal(l_sc[...], approx=False)          # exact
        attn = jnp.dot(ctx.reshape(K * t_q, D_MODEL).astype(bf16), wo_ref[...],
                       preferred_element_type=f32)
        h = _layernorm(h_ref[...].reshape(K * t_q, D_MODEL) + attn)
        f = jnp.dot(h.astype(bf16), wf1_ref[...], preferred_element_type=f32) + bf1_ref[...]
        f = jax.nn.gelu(f, approximate=True)
        f = jnp.dot(f.astype(bf16), wf2_ref[...], preferred_element_type=f32) + bf2_ref[...]
        h = _layernorm(h + f)
        logits = (jnp.dot(h.astype(bf16), wdec_ref[...], preferred_element_type=f32)
                  + bdec_ref[...])                            # (K*tQ, 128) lane-dense
        o_ref[...] = logits.reshape(K, t_q, N_CLASSES_PAD)


def _attn_head_call(q_q, k_all, v_all, k_s, v_s, h_q, p, *, eval_pos, P_pad, t_q, t_p):
    B_pad = q_q.shape[1]
    n_q = B_pad // t_q
    n_p = P_pad // t_p
    kern = functools.partial(_attn_head_kernel, eval_pos=eval_pos, t_q=t_q, t_p=t_p)
    qspec = pl.BlockSpec((K, t_q, D_MODEL), lambda qi, pi: (0, qi, 0))
    pspec = pl.BlockSpec((K, t_p, D_MODEL), lambda qi, pi: (0, pi, 0))
    wsp = lambda shp: pl.BlockSpec(shp, lambda qi, pi: (0, 0))   # resident weights
    return pl.pallas_call(
        kern,
        out_shape=jax.ShapeDtypeStruct((K, B_pad, N_CLASSES_PAD), jnp.float32),
        grid=(n_q, n_p),
        in_specs=[qspec, pspec, pspec, qspec, qspec, qspec,
                  wsp((D_MODEL, D_MODEL)),
                  wsp((D_MODEL, D_FF)), wsp((1, D_FF)),
                  wsp((D_FF, D_MODEL)), wsp((1, D_MODEL)),
                  wsp((D_MODEL, N_CLASSES_PAD)), wsp((1, N_CLASSES_PAD))],
        out_specs=pl.BlockSpec((K, t_q, N_CLASSES_PAD), lambda qi, pi: (0, qi, 0)),
        scratch_shapes=[pltpu.VMEM((K, t_q, 1), jnp.float32),        # running max
                        pltpu.VMEM((K, t_q, 1), jnp.float32),        # running denom
                        pltpu.VMEM((K, t_q, D_MODEL), jnp.float32)], # running numerator
        compiler_params=pltpu.CompilerParams(
            dimension_semantics=("parallel", "arbitrary"),
            # per-step live set ~7 MiB at tQ=128/tP=512 incl. double-buffered K/V tiles;
            # 32 MiB gives headroom on every generation (v5e default is only 16 MiB).
            vmem_limit_bytes=32 * 1024 * 1024),
    )(q_q, k_all, v_all, k_s, v_s, h_q,
      p['wo'], p['wf1'], p['bf1'], p['wf2'], p['bf2'], p['wdec'], p['bdec'])


# =======================  glue: Beta.forward (is_train=True)  ================
def _one_hot_cat(x_cat):
    parts = [jax.nn.one_hot(x_cat[:, j], c, dtype=jnp.float32)
             for j, c in enumerate(CAT_CARDS)]
    return jnp.concatenate(parts, axis=1)


def beta_forward_train(params, x_num, x_cat, cand_x_num, cand_x_cat, cand_y, key):
    cand_size = cand_y.shape[0]
    # TODO(synk): reference uses np.random.randint -> sampling WITH replacement; matched here.
    n_sample = min(1024, cand_size)
    idx = jax.random.randint(key, (n_sample,), 0, cand_size)
    cxn, cxc = cand_x_num[idx], cand_x_cat[idx]
    cy = cand_y[idx].astype(jnp.float32)

    # column_stack([num, one_hot(cat)])
    x_flat = jnp.concatenate([x_num, _one_hot_cat(x_cat)], axis=1)            # (B, D_FLAT)
    c_flat = jnp.concatenate([cxn, _one_hot_cat(cxc)], axis=1)                # (P, D_FLAT)

    # sublane-aligned (multiple-of-8) bucketing of the prefix / query counts; padded rows
    # are masked inside the kernels (y-encoding + attention columns) or sliced off.
    Bq = x_flat.shape[0]
    P = n_sample
    t_p = min(512, _round_up(P, 8));  P_pad = _round_up(P, t_p)
    t_q = min(128, _round_up(Bq, 8)); B_pad = _round_up(Bq, t_q)
    L_real = P_pad + B_pad
    t_seq = min(256, _round_up(L_real, 8)); L_pad = _round_up(L_real, t_seq)

    feats = jnp.zeros((L_pad, D_FLAT), jnp.float32)
    feats = feats.at[:P].set(c_flat).at[P_pad:P_pad + Bq].set(x_flat)
    y_full = jnp.zeros((L_pad, 1), jnp.float32).at[:P, 0].set(cy)

    # stage 1: affine ensemble + backbone + encoders + qkv (gridded, parallel)
    h_all, q_all, k_all, v_all = _frontend_call(feats, y_full, params,
                                                eval_pos=P, t_seq=t_seq)

    # stage 2: flash prefix-attention + FFN + decoder on the query rows only
    sl = slice(P_pad, P_pad + B_pad)
    logits_pad = _attn_head_call(q_all[:, sl], k_all, v_all,
                                 k_all[:, sl], v_all[:, sl], h_all[:, sl],
                                 params, eval_pos=P, P_pad=P_pad, t_q=t_q, t_p=t_p)

    logits = logits_pad[:, :Bq, :D_OUT]                                       # (K, B, D_OUT)
    # TabPFN output layout is (eval_pos, batch=k, classes); cast to float
    return jnp.transpose(logits, (1, 0, 2)).astype(jnp.float32)               # (B, K, D_OUT)


# =======================  deterministic parameter init  ======================
def init_params(key):
    ks = jax.random.split(key, 16)
    lin = lambda k, fi, fo: (jax.random.normal(k, (fi, fo), jnp.float32) / jnp.sqrt(fi))
    p = {}
    # ElementwiseAffineEnsemble weight, 'random-signs' init (num_embeddings is None)
    p['w_ens'] = jnp.where(jax.random.bernoulli(ks[0], 0.5, (K, D_FLAT)),
                           1.0, -1.0).astype(jnp.float32)
    p['w1'] = lin(ks[1], D_FLAT, D_BLOCK); p['b1'] = jnp.zeros((1, D_BLOCK), jnp.float32)
    w2 = lin(ks[2], D_BLOCK, D_BB); b2 = jnp.zeros((1, D_BB), jnp.float32)
    wx = lin(ks[3], D_BB, D_MODEL); bx = jnp.zeros((1, D_MODEL), jnp.float32)
    # fold backbone out-proj + TabPFN x-encoder into one bf16 weight (drops the (K*L,24)
    # intermediate and one bf16 round-trip relative to the reference fp16 path).
    p['w2x'] = (w2 @ wx).astype(jnp.bfloat16)
    p['b2x'] = b2 @ wx + bx
    p['wy'] = lin(ks[4], 1, D_MODEL)               # VPU broadcast, stays f32
    p['by'] = jnp.zeros((1, D_MODEL), jnp.float32)
    # fused qkv with the 1/sqrt(D) softmax scale folded into the q columns
    wq = lin(ks[5], D_MODEL, D_MODEL) * (1.0 / jnp.sqrt(jnp.float32(D_MODEL)))
    wk = lin(ks[6], D_MODEL, D_MODEL)
    wv = lin(ks[7], D_MODEL, D_MODEL)
    p['wqkv'] = jnp.concatenate([wq, wk, wv], axis=1).astype(jnp.bfloat16)   # (D, 3D)
    p['wo'] = lin(ks[8], D_MODEL, D_MODEL).astype(jnp.bfloat16)
    p['wf1'] = lin(ks[9], D_MODEL, D_FF).astype(jnp.bfloat16)
    p['bf1'] = jnp.zeros((1, D_FF), jnp.float32)
    p['wf2'] = lin(ks[10], D_FF, D_MODEL).astype(jnp.bfloat16)
    p['bf2'] = jnp.zeros((1, D_MODEL), jnp.float32)
    wdec = lin(ks[11], D_MODEL, N_CLASSES)
    # pad decoder to 128 output lanes -> lane-dense output store (sliced to :D_OUT outside)
    p['wdec'] = (jnp.zeros((D_MODEL, N_CLASSES_PAD), jnp.float32)
                 .at[:, :N_CLASSES].set(wdec).astype(jnp.bfloat16))
    p['bdec'] = jnp.zeros((1, N_CLASSES_PAD), jnp.float32)
    return p


# ================================  demo  =====================================
if __name__ == "__main__":
    root = jax.random.PRNGKey(0)
    kp, kdat, ksamp = jax.random.split(root, 3)
    params = init_params(kp)

    B, C = 8, 32                                          # train batch / candidate pool
    kxn, kxc, kcn, kcc, kcy = jax.random.split(kdat, 5)
    x_num = jax.random.normal(kxn, (B, D_NUM), jnp.float32)
    x_cat = jnp.stack([jax.random.randint(jax.random.fold_in(kxc, j), (B,), 0, c)
                       for j, c in enumerate(CAT_CARDS)], axis=1)
    cand_x_num = jax.random.normal(kcn, (C, D_NUM), jnp.float32)
    cand_x_cat = jnp.stack([jax.random.randint(jax.random.fold_in(kcc, j), (C,), 0, c)
                            for j, c in enumerate(CAT_CARDS)], axis=1)
    cand_y = jax.random.randint(kcy, (C,), 0, D_OUT)

    logits = beta_forward_train(params, x_num, x_cat, cand_x_num, cand_x_cat, cand_y, ksamp)
    jax.block_until_ready(logits)
    assert logits.shape == (B, K, D_OUT), logits.shape
    assert logits.dtype == jnp.float32
    assert bool(jnp.all(jnp.isfinite(logits)))
    print("KERNEL_OK")
</pallas_src>

<mosaic_0001>
module attributes {stable_mosaic.version = 11 : i64} {
  func.func @_frontend_kernel(%arg0: i32, %arg1: memref<40x14xf32, #tpu.memory_space<vmem>>, %arg2: memref<40x1xf32, #tpu.memory_space<vmem>>, %arg3: memref<4x14xf32, #tpu.memory_space<vmem>>, %arg4: memref<14x32xf32, #tpu.memory_space<vmem>>, %arg5: memref<1x32xf32, #tpu.memory_space<vmem>>, %arg6: memref<32x128xbf16, #tpu.memory_space<vmem>>, %arg7: memref<1x128xf32, #tpu.memory_space<vmem>>, %arg8: memref<1x128xf32, #tpu.memory_space<vmem>>, %arg9: memref<1x128xf32, #tpu.memory_space<vmem>>, %arg10: memref<128x384xbf16, #tpu.memory_space<vmem>>, %arg11: memref<4x40x128xf32, #tpu.memory_space<vmem>>, %arg12: memref<4x40x128xbf16, #tpu.memory_space<vmem>>, %arg13: memref<4x40x128xbf16, #tpu.memory_space<vmem>>, %arg14: memref<4x40x128xbf16, #tpu.memory_space<vmem>>) attributes {dimension_semantics = [#tpu.dimension_semantics<parallel>], iteration_bounds = array<i64: 1>, scalar_prefetch = 0 : i64, scratch_operands = 0 : i64, tpu.core_type = #tpu.core_type<tc>, window_params = [{transform_indices = @transform_0, window_bounds = array<i64: 40, 14>}, {transform_indices = @transform_1, window_bounds = array<i64: 40, 1>}, {pipeline_mode = #tpu.pipeline_mode<synchronous>, transform_indices = @transform_2, window_bounds = array<i64: 4, 14>}, {pipeline_mode = #tpu.pipeline_mode<synchronous>, transform_indices = @transform_3, window_bounds = array<i64: 14, 32>}, {pipeline_mode = #tpu.pipeline_mode<synchronous>, transform_indices = @transform_4, window_bounds = array<i64: 1, 32>}, {pipeline_mode = #tpu.pipeline_mode<synchronous>, transform_indices = @transform_5, window_bounds = array<i64: 32, 128>}, {pipeline_mode = #tpu.pipeline_mode<synchronous>, transform_indices = @transform_6, window_bounds = array<i64: 1, 128>}, {pipeline_mode = #tpu.pipeline_mode<synchronous>, transform_indices = @transform_7, window_bounds = array<i64: 1, 128>}, {pipeline_mode = #tpu.pipeline_mode<synchronous>, transform_indices = @transform_8, window_bounds = array<i64: 1, 128>}, {pipeline_mode = #tpu.pipeline_mode<synchronous>, transform_indices = @transform_9, window_bounds = array<i64: 128, 384>}, {transform_indices = @transform_10, window_bounds = array<i64: 4, 40, 128>}, {transform_indices = @transform_11, window_bounds = array<i64: 4, 40, 128>}, {transform_indices = @transform_12, window_bounds = array<i64: 4, 40, 128>}, {transform_indices = @transform_13, window_bounds = array<i64: 4, 40, 128>}]} {
    %c0 = arith.constant 0 : index
    %c0_0 = arith.constant 0 : index
    %0 = vector.load %arg1[%c0, %c0_0] : memref<40x14xf32, #tpu.memory_space<vmem>>, vector<40x14xf32>
    %c0_1 = arith.constant 0 : index
    %c0_2 = arith.constant 0 : index
    %1 = vector.load %arg3[%c0_1, %c0_2] : memref<4x14xf32, #tpu.memory_space<vmem>>, vector<4x14xf32>
    %2 = vector.shape_cast %0 : vector<40x14xf32> to vector<1x40x14xf32>
    %3 = vector.shape_cast %1 : vector<4x14xf32> to vector<4x1x14xf32>
    %4 = vector.broadcast %2 : vector<1x40x14xf32> to vector<4x40x14xf32>
    %5 = vector.broadcast %3 : vector<4x1x14xf32> to vector<4x40x14xf32>
    %6 = arith.mulf %4, %5 : vector<4x40x14xf32>
    %7 = vector.shape_cast %6 : vector<4x40x14xf32> to vector<160x14xf32>
    %c0_3 = arith.constant 0 : index
    %c0_4 = arith.constant 0 : index
    %8 = vector.load %arg4[%c0_3, %c0_4] : memref<14x32xf32, #tpu.memory_space<vmem>>, vector<14x32xf32>
    %cst = arith.constant dense<0.000000e+00> : vector<160x32xf32>
    %9 = tpu.matmul %7, %8, %cst {dimension_numbers = #tpu.dot_dimension_numbers<[1], [0], [0], [1], [0, 0, 1, 1], [], []>} : vector<160x14xf32>, vector<14x32xf32>, vector<160x32xf32> -> vector<160x32xf32>
    %c0_5 = arith.constant 0 : index
    %c0_6 = arith.constant 0 : index
    %10 = vector.load %arg5[%c0_5, %c0_6] : memref<1x32xf32, #tpu.memory_space<vmem>>, vector<1x32xf32>
    %11 = vector.broadcast %10 : vector<1x32xf32> to vector<160x32xf32>
    %12 = arith.addf %9, %11 : vector<160x32xf32>
    %cst_7 = arith.constant 0.000000e+00 : f32
    %13 = vector.broadcast %cst_7 : f32 to vector<160x32xf32>
    %14 = arith.maximumf %12, %13 : vector<160x32xf32>
    %15 = arith.truncf %14 : vector<160x32xf32> to vector<160x32xbf16>
    %c0_8 = arith.constant 0 : index
    %c0_9 = arith.constant 0 : index
    %16 = vector.load %arg6[%c0_8, %c0_9] : memref<32x128xbf16, #tpu.memory_space<vmem>>, vector<32x128xbf16>
    %cst_10 = arith.constant dense<0.000000e+00> : vector<160x128xf32>
    %17 = tpu.matmul %15, %16, %cst_10 {dimension_numbers = #tpu.dot_dimension_numbers<[1], [0], [0], [1], [0, 0, 1, 1], [], []>} : vector<160x32xbf16>, vector<32x128xbf16>, vector<160x128xf32> -> vector<160x128xf32>
    %c0_11 = arith.constant 0 : index
    %c0_12 = arith.constant 0 : index
    %18 = vector.load %arg7[%c0_11, %c0_12] : memref<1x128xf32, #tpu.memory_space<vmem>>, vector<1x128xf32>
    %19 = vector.broadcast %18 : vector<1x128xf32> to vector<160x128xf32>
    %20 = arith.addf %17, %19 : vector<160x128xf32>
    %c40_i32 = arith.constant 40 : i32
    %21 = arith.muli %arg0, %c40_i32 : i32
    %22 = tpu.iota {dimensions = array<i32: 0>} : vector<40x1xi32>
    %23 = vector.broadcast %21 : i32 to vector<40x1xi32>
    %24 = arith.addi %23, %22 : vector<40x1xi32>
    %c32_i32 = arith.constant 32 : i32
    %25 = vector.broadcast %c32_i32 : i32 to vector<40x1xi32>
    %26 = arith.cmpi slt, %24, %25 : vector<40x1xi32>
    %27 = arith.extui %26 : vector<40x1xi1> to vector<40x1xi32>
    %28 = arith.sitofp %27 : vector<40x1xi32> to vector<40x1xf32>
    %c0_13 = arith.constant 0 : index
    %c0_14 = arith.constant 0 : index
    %29 = vector.load %arg2[%c0_13, %c0_14] : memref<40x1xf32, #tpu.memory_space<vmem>>, vector<40x1xf32>
    %c0_15 = arith.constant 0 : index
    %c0_16 = arith.constant 0 : index
    %30 = vector.load %arg8[%c0_15, %c0_16] : memref<1x128xf32, #tpu.memory_space<vmem>>, vector<1x128xf32>
    %31 = vector.broadcast %29 : vector<40x1xf32> to vector<40x128xf32>
    %32 = vector.broadcast %30 : vector<1x128xf32> to vector<40x128xf32>
    %33 = arith.mulf %31, %32 : vector<40x128xf32>
    %c0_17 = arith.constant 0 : index
    %c0_18 = arith.constant 0 : index
    %34 = vector.load %arg9[%c0_17, %c0_18] : memref<1x128xf32, #tpu.memory_space<vmem>>, vector<1x128xf32>
    %35 = vector.broadcast %34 : vector<1x128xf32> to vector<40x128xf32>
    %36 = arith.addf %33, %35 : vector<40x128xf32>
    %37 = vector.broadcast %28 : vector<40x1xf32> to vector<40x128xf32>
    %38 = arith.mulf %36, %37 : vector<40x128xf32>
    %39 = vector.shape_cast %20 : vector<160x128xf32> to vector<4x40x128xf32>
    %40 = vector.shape_cast %38 : vector<40x128xf32> to vector<1x40x128xf32>
    %41 = vector.broadcast %40 : vector<1x40x128xf32> to vector<4x40x128xf32>
    %42 = arith.addf %39, %41 : vector<4x40x128xf32>
    %43 = vector.shape_cast %42 : vector<4x40x128xf32> to vector<160x128xf32>
    %44 = arith.truncf %43 : vector<160x128xf32> to vector<160x128xbf16>
    %c0_19 = arith.constant 0 : index
    %c0_20 = arith.constant 0 : index
    %45 = vector.load %arg10[%c0_19, %c0_20] : memref<128x384xbf16, #tpu.memory_space<vmem>>, vector<128x384xbf16>
    %cst_21 = arith.constant dense<0.000000e+00> : vector<160x384xf32>
    %46 = tpu.matmul %44, %45, %cst_21 {dimension_numbers = #tpu.dot_dimension_numbers<[1], [0], [0], [1], [0, 0, 1, 1], [], []>} : vector<160x128xbf16>, vector<128x384xbf16>, vector<160x384xf32> -> vector<160x384xf32>
    %47 = vector.shape_cast %43 : vector<160x128xf32> to vector<4x40x128xf32>
    %c0_22 = arith.constant 0 : index
    %c0_23 = arith.constant 0 : index
    %c0_24 = arith.constant 0 : index
    %48 = vector.load %arg11[%c0_22, %c0_23, %c0_24] : memref<4x40x128xf32, #tpu.memory_space<vmem>>, vector<4x40x128xf32>
    tpu.vector_store %arg11[%c0_22, %c0_23, %c0_24], %47 {strides = array<i32>} : memref<4x40x128xf32, #tpu.memory_space<vmem>>, vector<4x40x128xf32>,
    %49 = vector.extract_strided_slice %46 {offsets = [0, 0], sizes = [160, 128], strides = [1, 1]} : vector<160x384xf32> to vector<160x128xf32>
    %50 = vector.shape_cast %49 : vector<160x128xf32> to vector<4x40x128xf32>
    %51 = arith.truncf %50 : vector<4x40x128xf32> to vector<4x40x128xbf16>
    %c0_25 = arith.constant 0 : index
    %c0_26 = arith.constant 0 : index
    %c0_27 = arith.constant 0 : index
    %52 = vector.load %arg12[%c0_25, %c0_26, %c0_27] : memref<4x40x128xbf16, #tpu.memory_space<vmem>>, vector<4x40x128xbf16>
    tpu.vector_store %arg12[%c0_25, %c0_26, %c0_27], %51 {strides = array<i32>} : memref<4x40x128xbf16, #tpu.memory_space<vmem>>, vector<4x40x128xbf16>,
    %53 = vector.extract_strided_slice %46 {offsets = [0, 128], sizes = [160, 128], strides = [1, 1]} : vector<160x384xf32> to vector<160x128xf32>
    %54 = vector.shape_cast %53 : vector<160x128xf32> to vector<4x40x128xf32>
    %55 = arith.truncf %54 : vector<4x40x128xf32> to vector<4x40x128xbf16>
    %c0_28 = arith.constant 0 : index
    %c0_29 = arith.constant 0 : index
    %c0_30 = arith.constant 0 : index
    %56 = vector.load %arg13[%c0_28, %c0_29, %c0_30] : memref<4x40x128xbf16, #tpu.memory_space<vmem>>, vector<4x40x128xbf16>
    tpu.vector_store %arg13[%c0_28, %c0_29, %c0_30], %55 {strides = array<i32>} : memref<4x40x128xbf16, #tpu.memory_space<vmem>>, vector<4x40x128xbf16>,
    %57 = vector.extract_strided_slice %46 {offsets = [0, 256], sizes = [160, 128], strides = [1, 1]} : vector<160x384xf32> to vector<160x128xf32>
    %58 = vector.shape_cast %57 : vector<160x128xf32> to vector<4x40x128xf32>
    %59 = arith.truncf %58 : vector<4x40x128xf32> to vector<4x40x128xbf16>
    %c0_31 = arith.constant 0 : index
    %c0_32 = arith.constant 0 : index
    %c0_33 = arith.constant 0 : index
    %60 = vector.load %arg14[%c0_31, %c0_32, %c0_33] : memref<4x40x128xbf16, #tpu.memory_space<vmem>>, vector<4x40x128xbf16>
    tpu.vector_store %arg14[%c0_31, %c0_32, %c0_33], %59 {strides = array<i32>} : memref<4x40x128xbf16, #tpu.memory_space<vmem>>, vector<4x40x128xbf16>,
    return
  }
  func.func @transform_0(%arg0: i32) -> (i32, i32) {
    %c0_i32 = arith.constant 0 : i32
    %c0_i32_0 = arith.constant 0 : i32
    return %arg0, %c0_i32 : i32, i32
  }
  func.func @transform_1(%arg0: i32) -> (i32, i32) {
    %c0_i32 = arith.constant 0 : i32
    %c0_i32_0 = arith.constant 0 : i32
    return %arg0, %c0_i32 : i32, i32
  }
  func.func @transform_2(%arg0: i32) -> (i32, i32) {
    %c0_i32 = arith.constant 0 : i32
    %c0_i32_0 = arith.constant 0 : i32
    %c0_i32_1 = arith.constant 0 : i32
    return %c0_i32, %c0_i32_0 : i32, i32
  }
  func.func @transform_3(%arg0: i32) -> (i32, i32) {
    %c0_i32 = arith.constant 0 : i32
    %c0_i32_0 = arith.constant 0 : i32
    %c0_i32_1 = arith.constant 0 : i32
    return %c0_i32, %c0_i32_0 : i32, i32
  }
  func.func @transform_4(%arg0: i32) -> (i32, i32) {
    %c0_i32 = arith.constant 0 : i32
    %c0_i32_0 = arith.constant 0 : i32
    %c0_i32_1 = arith.constant 0 : i32
    return %c0_i32, %c0_i32_0 : i32, i32
  }
  func.func @transform_5(%arg0: i32) -> (i32, i32) {
    %c0_i32 = arith.constant 0 : i32
    %c0_i32_0 = arith.constant 0 : i32
    %c0_i32_1 = arith.constant 0 : i32
    return %c0_i32, %c0_i32_0 : i32, i32
  }
  func.func @transform_6(%arg0: i32) -> (i32, i32) {
    %c0_i32 = arith.constant 0 : i32
    %c0_i32_0 = arith.constant 0 : i32
    %c0_i32_1 = arith.constant 0 : i32
    return %c0_i32, %c0_i32_0 : i32, i32
  }
  func.func @transform_7(%arg0: i32) -> (i32, i32) {
    %c0_i32 = arith.constant 0 : i32
    %c0_i32_0 = arith.constant 0 : i32
    %c0_i32_1 = arith.constant 0 : i32
    return %c0_i32, %c0_i32_0 : i32, i32
  }
  func.func @transform_8(%arg0: i32) -> (i32, i32) {
    %c0_i32 = arith.constant 0 : i32
    %c0_i32_0 = arith.constant 0 : i32
    %c0_i32_1 = arith.constant 0 : i32
    return %c0_i32, %c0_i32_0 : i32, i32
  }
  func.func @transform_9(%arg0: i32) -> (i32, i32) {
    %c0_i32 = arith.constant 0 : i32
    %c0_i32_0 = arith.constant 0 : i32
    %c0_i32_1 = arith.constant 0 : i32
    return %c0_i32, %c0_i32_0 : i32, i32
  }
  func.func @transform_10(%arg0: i32) -> (i32, i32, i32) {
    %c0_i32 = arith.constant 0 : i32
    %c0_i32_0 = arith.constant 0 : i32
    %c0_i32_1 = arith.constant 0 : i32
    return %c0_i32, %arg0, %c0_i32_0 : i32, i32, i32
  }
  func.func @transform_11(%arg0: i32) -> (i32, i32, i32) {
    %c0_i32 = arith.constant 0 : i32
    %c0_i32_0 = arith.constant 0 : i32
    %c0_i32_1 = arith.constant 0 : i32
    return %c0_i32, %arg0, %c0_i32_0 : i32, i32, i32
  }
  func.func @transform_12(%arg0: i32) -> (i32, i32, i32) {
    %c0_i32 = arith.constant 0 : i32
    %c0_i32_0 = arith.constant 0 : i32
    %c0_i32_1 = arith.constant 0 : i32
    return %c0_i32, %arg0, %c0_i32_0 : i32, i32, i32
  }
  func.func @transform_13(%arg0: i32) -> (i32, i32, i32) {
    %c0_i32 = arith.constant 0 : i32
    %c0_i32_0 = arith.constant 0 : i32
    %c0_i32_1 = arith.constant 0 : i32
    return %c0_i32, %arg0, %c0_i32_0 : i32, i32, i32
  }
}

</mosaic_0001>

<llo_original>
// kernel: tpu_custom_call.1
$region0: #{tpu_custom_call.1}
  #allocation0 [shape = 'u32[]', space=smem, size = 0x4, offset = 0x4, fixed_abs, tag = 'smem constant byte address 0x4 - core index']
  #allocation1 [shape = 'u32[144,128]{1,0:T(1,128)}', space=vmem, size = 0x12000, scoped, tag = 'internal scratch']
  %s0 = inlined_call_operand.vmem [shape: f32[40,14], index: 0, kind: input, shape index: {}]
  %s1 = inlined_call_operand.vmem [shape: f32[40,1], index: 1, kind: input, shape index: {}]
  %s2 = inlined_call_operand.vmem [shape: f32[4,14], index: 2, kind: input, shape index: {}]
  %s3 = inlined_call_operand.vmem [shape: f32[14,32], index: 3, kind: input, shape index: {}]
  %s4 = inlined_call_operand.vmem [shape: f32[1,32], index: 4, kind: input, shape index: {}]
  %s5 = inlined_call_operand.vmem [shape: bf16[32,128], index: 5, kind: input, shape index: {}]
  %s6 = inlined_call_operand.vmem [shape: f32[1,128], index: 6, kind: input, shape index: {}]
  %s7 = inlined_call_operand.vmem [shape: f32[1,128], index: 7, kind: input, shape index: {}]
  %s8 = inlined_call_operand.vmem [shape: f32[1,128], index: 8, kind: input, shape index: {}]
  %s9 = inlined_call_operand.hbm [shape: bf16[128,384], index: 9, kind: input, shape index: {}]
  %s10 = inlined_call_operand.hbm [shape: f32[4,40,128], index: 10, kind: output, shape index: {0}]
  %s11 = inlined_call_operand.hbm [shape: bf16[4,40,128], index: 11, kind: output, shape index: {1}]
  %s12 = inlined_call_operand.hbm [shape: bf16[4,40,128], index: 12, kind: output, shape index: {2}]
  %s13 = inlined_call_operand.hbm [shape: bf16[4,40,128], index: 13, kind: output, shape index: {3}]
  %14 = xla_tuple %s10, %s11, %s12, %s13
  %s15 = sld [smem:[#allocation0]]
  $region78: #{tpu_custom_call.1} parent=0
    _
  %s17 = ssub.s32 1, %s15
  %s18 = scalar_select 0, %s17, %s15
  $region1: #{tpu_custom_call.1} parent=0
    #allocation2 [shape = 'u8[98304]{0}', space=vmem, size = 0x18000, scoped, tag = 'input window, operand 9, single buffered']
    #allocation3 [shape = 's32[1]{0}', space=sflag, size = 0x4, scoped, tag = 'scoped memory for tpu_custom_call.1']
    #allocation4 [shape = 's32[1]{0}', space=sflag, size = 0x4, scoped, tag = 'scoped memory for tpu_custom_call.1']
    #allocation5 [shape = 'u8[81920]{0}', space=vmem, size = 0x14000, scoped, tag = 'output window, operand 0, single buffered']
    #allocation6 [shape = 'u8[40960]{0}', space=vmem, size = 0xa000, scoped, tag = 'output window, operand 1, single buffered']
    #allocation7 [shape = 's32[1]{0}', space=sflag, size = 0x4, scoped, tag = 'scoped memory for tpu_custom_call.1']
    #allocation8 [shape = 'u8[40960]{0}', space=vmem, size = 0xa000, scoped, tag = 'output window, operand 2, single buffered']
    #allocation9 [shape = 'u8[40960]{0}', space=vmem, size = 0xa000, scoped, tag = 'output window, operand 3, single buffered']
    #allocation10 [shape = 's32[1]{0}', space=sflag, size = 0x4, scoped, tag = 'scoped memory for tpu_custom_call.1']
    %19 = vsyncpa [#allocation3], 0
    %20 = vsyncpa [#allocation4], 0
    %21 = vsyncpa [#allocation7], 0
    %22 = vsyncpa [#allocation10], 0
    // Predicated region
    $region2: #{tpu_custom_call.1} parent=1 // pred_check
      _
    $region3: #{tpu_custom_call.1} parent=1 // pred_check_branch
      %24 = sbr.rel (0) target = $region5
    $region4: #{tpu_custom_call.1} parent=1 // pred_region
      _
    $region5: #{tpu_custom_call.1} parent=1 // pred_fallthru
      _
    // Predicated region
    $region6: #{tpu_custom_call.1} parent=1 // pred_check
      _
    $region7: #{tpu_custom_call.1} parent=1 // pred_check_branch
      %26 = sbr.rel (0) target = $region9
    $region8: #{tpu_custom_call.1} parent=1 // pred_region
      _
    $region9: #{tpu_custom_call.1} parent=1 // pred_fallthru
      _
    // Predicated region
    $region10: #{tpu_custom_call.1} parent=1 // pred_check
      _
    $region11: #{tpu_custom_call.1} parent=1 // pred_check_branch
      %28 = sbr.rel (0) target = $region13
    $region12: #{tpu_custom_call.1} parent=1 // pred_region
      _
    $region13: #{tpu_custom_call.1} parent=1 // pred_fallthru
      _
    // Predicated region
    $region14: #{tpu_custom_call.1} parent=1 // pred_check
      _
    $region15: #{tpu_custom_call.1} parent=1 // pred_check_branch
      %30 = sbr.rel (0) target = $region17
    $region16: #{tpu_custom_call.1} parent=1 // pred_region
      _
    $region17: #{tpu_custom_call.1} parent=1 // pred_fallthru
      _
    // Predicated region
    $region18: #{tpu_custom_call.1} parent=1 // pred_check
      _
    $region19: #{tpu_custom_call.1} parent=1 // pred_check_branch
      %32 = sbr.rel (0) target = $region21
    $region20: #{tpu_custom_call.1} parent=1 // pred_region
      _
    $region21: #{tpu_custom_call.1} parent=1 // pred_fallthru
      _
    // Predicated region
    $region22: #{tpu_custom_call.1} parent=1 // pred_check
      _
    $region23: #{tpu_custom_call.1} parent=1 // pred_check_branch
      %34 = sbr.rel (0) target = $region25
    $region24: #{tpu_custom_call.1} parent=1 // pred_region
      _
    $region25: #{tpu_custom_call.1} parent=1 // pred_fallthru
      _
    // Predicated region
    $region26: #{tpu_custom_call.1} parent=1 // pred_check
      _
    $region27: #{tpu_custom_call.1} parent=1 // pred_check_branch
      %36 = sbr.rel (0) target = $region29
    $region28: #{tpu_custom_call.1} parent=1 // pred_region
      _
    $region29: #{tpu_custom_call.1} parent=1 // pred_fallthru
      _
    // Predicated region
    $region30: #{tpu_custom_call.1} parent=1 // pred_check
      _
    $region31: #{tpu_custom_call.1} parent=1 // pred_check_branch
      %38 = sbr.rel (0) target = $region33
    $region32: #{tpu_custom_call.1} parent=1 // pred_region
      _
    $region33: #{tpu_custom_call.1} parent=1 // pred_fallthru
      _
    // Predicated region
    $region34: #{tpu_custom_call.1} parent=1 // pred_check
      _
    $region35: #{tpu_custom_call.1} parent=1 // pred_check_branch
      %40 = sbr.rel (0) target = $region37
    $region36: #{tpu_custom_call.1} parent=1 // pred_region
      _
    $region37: #{tpu_custom_call.1} parent=1 // pred_fallthru
      _
    // Predicated region
    $region38: #{tpu_custom_call.1} parent=1 // pred_check
      _
    $region39: #{tpu_custom_call.1} parent=1 // pred_check_branch
      %42 = sbr.rel (0) target = $region41
    $region40: #{tpu_custom_call.1} parent=1 // pred_region
      %s44 = ssub.s32 3072, 3072
      %45 = vsyncadd [#allocation3], %s44
      %s46 = sshll.u32 [#allocation2], 4
      %s47 = int_to_ptr.vmem [resolvable:$true] %s46
      %52 = dma.hbm_to_vmem [thread:$0]  %s9, 3072, %s47, [#allocation3], 192, 192, 12
    $region41: #{tpu_custom_call.1} parent=1 // pred_fallthru
      _
    // Predicated region
    $region42: #{tpu_custom_call.1} parent=1 // pred_check
      _
    $region43: #{tpu_custom_call.1} parent=1 // pred_check_branch
      %54 = sbr.rel (0) target = $region45
    $region44: #{tpu_custom_call.1} parent=1 // pred_region
      %55 = dma.done [#allocation3], 3072
    $region45: #{tpu_custom_call.1} parent=1 // pred_fallthru
      _
    %v57 = vld [vmem:[%s0] sm:$0xff]
    %v58 = vld [vmem:[%s0 + $0x8] sm:$0xff]
    %v59 = vld [vmem:[%s0 + $0x10] sm:$0xff]
    %v60 = vld [vmem:[%s0 + $0x18] sm:$0xff]
    %v61 = vld [vmem:[%s0 + $0x20] sm:$0xff]
    %v62 = vld [vmem:[%s2] sm:$0xf]
    %v65 = vunpack.c.l.s4 1966171168
    %v66 = vunpack.c.0.s8 %v65
    %v67 = vlaneseq
    %v68 = vshrl.u32 %v67, 7
    %v69 = vsub.s32 %v66, %v68
    %v70 = vrot.slane %v62, %v69
    %v71 = vcombine.high %v70, %v70
    %v73 = vunpack.c.l.s4 1966171168
    %v74 = vunpack.c.0.s8 %v73
    %v75 = vlaneseq
    %v76 = vshrl.u32 %v75, 7
    %v77 = vsub.s32 %v74, %v76
    %v78 = vrot.slane %v70, %v77
    %v80 = vunpack.c.l.s4 1966171168
    %v81 = vunpack.c.0.s8 %v80
    %v82 = vlaneseq
    %v83 = vshrl.u32 %v82, 7
    %v84 = vsub.s32 %v81, %v83
    %v85 = vrot.slane %v71, %v84
    %v86 = vcombine.high %v78, %v78
    %v87 = vcombine.high %v85, %v85
    %v88 = vlaneseq
    %v89 = vshrl.u32 %v88, 7
    %v90 = vsub.s32 0, %v89
    %v91 = vrot.slane %v78, %v90
    %v92 = vlaneseq
    %v93 = vshrl.u32 %v92, 7
    %v94 = vsub.s32 0, %v93
    %v95 = vrot.slane %v85, %v94
    %v96 = vlaneseq
    %v97 = vshrl.u32 %v96, 7
    %v98 = vsub.s32 0, %v97
    %v99 = vrot.slane %v86, %v98
    %v100 = vlaneseq
    %v101 = vshrl.u32 %v100, 7
    %v102 = vsub.s32 0, %v101
    %v103 = vrot.slane %v87, %v102
    %v108 = vmul.f32 %v57, %v91
    %v109 = vmul.f32 %v58, %v91
    %v110 = vmul.f32 %v59, %v91
    %v111 = vmul.f32 %v60, %v91
    %v112 = vmul.f32 %v61, %v91
    %v113 = vmul.f32 %v57, %v95
    %v114 = vmul.f32 %v58, %v95
    %v115 = vmul.f32 %v59, %v95
    %v116 = vmul.f32 %v60, %v95
    %v117 = vmul.f32 %v61, %v95
    %v118 = vmul.f32 %v57, %v99
    %v119 = vmul.f32 %v58, %v99
    %v120 = vmul.f32 %v59, %v99
    %v121 = vmul.f32 %v60, %v99
    %v122 = vmul.f32 %v61, %v99
    %v123 = vmul.f32 %v57, %v103
    %v124 = vmul.f32 %v58, %v103
    %v125 = vmul.f32 %v59, %v103
    %v126 = vmul.f32 %v60, %v103
    %v127 = vmul.f32 %v61, %v103
    %v128 = vld [vmem:[%s3] sm:$0xff]
    %v129 = vld [vmem:[%s3 + $0x8] sm:$0x3f]
    %v130 = vld [vmem:[%s4] sm:$0x1]
    %v132 = vlaneseq
    %v133 = vshrl.u32 %v132, 7
    %v134 = vsub.s32 0, %v133
    %v135 = vrot.slane %v130, %v134
    %vm137 = vcmask 113664
    %v139 = vsel %vm137, %v108, 0
    %v142 = vsel %vm137, %v109, 0
    %v145 = vsel %vm137, %v110, 0
    %v148 = vsel %vm137, %v111, 0
    %v151 = vsel %vm137, %v112, 0
    %v154 = vsel %vm137, %v113, 0
    %v157 = vsel %vm137, %v114, 0
    %v160 = vsel %vm137, %v115, 0
    %v163 = vsel %vm137, %v116, 0
    %v166 = vsel %vm137, %v117, 0
    %v169 = vsel %vm137, %v118, 0
    %v172 = vsel %vm137, %v119, 0
    %v175 = vsel %vm137, %v120, 0
    %v178 = vsel %vm137, %v121, 0
    %v181 = vsel %vm137, %v122, 0
    %v184 = vsel %vm137, %v123, 0
    %v187 = vsel %vm137, %v124, 0
    %v190 = vsel %vm137, %v125, 0
    %v193 = vsel %vm137, %v126, 0
    %v196 = vsel %vm137, %v127, 0
    %vm198 = vcmask 1045504
    %v200 = vsel %vm198, %v129, 0
    %202 = vmatprep.subr.mxu0 0.0
    %203 = vmatpush1.msra.mxu0 %v128
    %204 = vmatprep.subr.mxu0 0.0
    %205 = vmatpush1.msra.mxu0 %v200
    %206 = vmatprep.subr.mxu0 0.0
    %207 = vmatpush1.msra.mxu0 0.0
    %208 = vmatprep.subr.mxu0 0.0
    %209 = vmatpush1.msra.mxu0 0.0
    %210 = vmatprep.subr.mxu0 0.0
    %211 = vmatpush1.msra.mxu0 0.0
    %212 = vmatprep.subr.mxu0 0.0
    %213 = vmatpush1.msra.mxu0 0.0
    %214 = vmatprep.subr.mxu0 0.0
    %215 = vmatpush1.msra.mxu0 0.0
    %216 = vmatprep.subr.mxu0 0.0
    %217 = vmatpush1.msra.mxu0 0.0
    %218 = vmatprep.subr.mxu0 0.0
    %219 = vmatpush1.msra.mxu0 0.0
    %220 = vmatprep.subr.mxu0 0.0
    %221 = vmatpush1.msra.mxu0 0.0
    %222 = vmatprep.subr.mxu0 0.0
    %223 = vmatpush1.msra.mxu0 0.0
    %224 = vmatprep.subr.mxu0 0.0
    %225 = vmatpush1.msra.mxu0 0.0
    %226 = vmatprep.subr.mxu0 0.0
    %227 = vmatpush1.msra.mxu0 0.0
    %228 = vmatprep.subr.mxu0 0.0
    %229 = vmatpush1.msra.mxu0 0.0
    %230 = vmatprep.subr.mxu0 0.0
    %231 = vmatpush1.msra.mxu0 0.0
    %232 = vmatprep.subr.mxu0 0.0
    %233 = vmatpush1.msra.mxu0 0.0
    %234 = vmatprep.subr.mxu0 0.0
    %235 = vmatpush1.msra.mxu0 0.0
    %236 = vmatprep.subr.mxu0 0.0
    %237 = vmatpush1.msra.mxu0 0.0
    %238 = vmatprep.subr.mxu0 0.0
    %239 = vmatpush1.msra.mxu0 0.0
    %240 = vmatprep.subr.mxu0 0.0
    %241 = vmatpush1.msra.mxu0 0.0
    %242 = vmatprep.subr.mxu0 0.0
    %243 = vmatpush1.msra.mxu0 0.0
    %244 = vmatprep.subr.mxu0 0.0
    %245 = vmatpush1.msra.mxu0 0.0
    %246 = vmatprep.subr.mxu0 0.0
    %247 = vmatpush1.msra.mxu0 0.0
    %248 = vmatprep.subr.mxu0 0.0
    %249 = vmatpush1.msra.mxu0 0.0
    %250 = vmatprep.subr.mxu0 0.0
    %251 = vmatpush1.msra.mxu0 0.0
    %252 = vmatprep.subr.mxu0 0.0
    %253 = vmatpush1.msra.mxu0 0.0
    %254 = vmatprep.subr.mxu0 0.0
    %255 = vmatpush1.msra.mxu0 0.0
    %256 = vmatprep.subr.mxu0 0.0
    %257 = vmatpush1.msra.mxu0 0.0
    %258 = vmatprep.subr.mxu0 0.0
    %259 = vmatpush1.msra.mxu0 0.0
    %260 = vmatprep.subr.mxu0 0.0
    %261 = vmatpush1.msra.mxu0 0.0
    %262 = vmatprep.subr.mxu0 0.0
    %263 = vmatpush1.msra.mxu0 0.0
    %264 = vmatprep.subr.mxu0 0.0
    %265 = vmatpush1.msra.mxu0 0.0
    %266 = vmatprep.mubr.f32.mxu0 0.0
    %267 = vmatmul.mubr.f32.gmra.mrb[0].mxu0 %v139
    %v268 = vpop.f32.mrb[0].mxu0
    %v269 = vadd.f32 %v135, %v268
    %v270 = vpop.f32.mrb[0].mxu0
    %271 = vmatprep.mubr.f32.mxu0 0.0
    %272 = vmatmul.mubr.f32.gmra.mrb[0].mxu0 %v142
    %v273 = vpop.f32.mrb[0].mxu0
    %v274 = vadd.f32 %v135, %v273
    %v275 = vpop.f32.mrb[0].mxu0
    %276 = vmatprep.mubr.f32.mxu0 0.0
    %277 = vmatmul.mubr.f32.gmra.mrb[0].mxu0 %v145
    %v278 = vpop.f32.mrb[0].mxu0
    %v279 = vadd.f32 %v135, %v278
    %v280 = vpop.f32.mrb[0].mxu0
    %281 = vmatprep.mubr.f32.mxu0 0.0
    %282 = vmatmul.mubr.f32.gmra.mrb[0].mxu0 %v148
    %v283 = vpop.f32.mrb[0].mxu0
    %v284 = vadd.f32 %v135, %v283
    %v285 = vpop.f32.mrb[0].mxu0
    %286 = vmatprep.mubr.f32.mxu0 0.0
    %287 = vmatmul.mubr.f32.gmra.mrb[0].mxu0 %v151
    %v288 = vpop.f32.mrb[0].mxu0
    %v289 = vadd.f32 %v135, %v288
    %v290 = vpop.f32.mrb[0].mxu0
    %291 = vmatprep.mubr.f32.mxu0 0.0
    %292 = vmatmul.mubr.f32.gmra.mrb[0].mxu0 %v154
    %v293 = vpop.f32.mrb[0].mxu0
    %v294 = vadd.f32 %v135, %v293
    %v295 = vpop.f32.mrb[0].mxu0
    %296 = vmatprep.mubr.f32.mxu0 0.0
    %297 = vmatmul.mubr.f32.gmra.mrb[0].mxu0 %v157
    %v298 = vpop.f32.mrb[0].mxu0
    %v299 = vadd.f32 %v135, %v298
    %v300 = vpop.f32.mrb[0].mxu0
    %301 = vmatprep.mubr.f32.mxu0 0.0
    %302 = vmatmul.mubr.f32.gmra.mrb[0].mxu0 %v160
    %v303 = vpop.f32.mrb[0].mxu0
    %v304 = vadd.f32 %v135, %v303
    %v305 = vpop.f32.mrb[0].mxu0
    %306 = vmatprep.mubr.f32.mxu0 0.0
    %307 = vmatmul.mubr.f32.gmra.mrb[0].mxu0 %v163
    %v308 = vpop.f32.mrb[0].mxu0
    %v309 = vadd.f32 %v135, %v308
    %v310 = vpop.f32.mrb[0].mxu0
    %311 = vmatprep.mubr.f32.mxu0 0.0
    %312 = vmatmul.mubr.f32.gmra.mrb[0].mxu0 %v166
    %v313 = vpop.f32.mrb[0].mxu0
    %v314 = vadd.f32 %v135, %v313
    %v315 = vpop.f32.mrb[0].mxu0
    %316 = vmatprep.mubr.f32.mxu0 0.0
    %317 = vmatmul.mubr.f32.gmra.mrb[0].mxu0 %v169
    %v318 = vpop.f32.mrb[0].mxu0
    %v319 = vadd.f32 %v135, %v318
    %v320 = vpop.f32.mrb[0].mxu0
    %321 = vmatprep.mubr.f32.mxu0 0.0
    %322 = vmatmul.mubr.f32.gmra.mrb[0].mxu0 %v172
    %v323 = vpop.f32.mrb[0].mxu0
    %v324 = vadd.f32 %v135, %v323
    %v325 = vpop.f32.mrb[0].mxu0
    %326 = vmatprep.mubr.f32.mxu0 0.0
    %327 = vmatmul.mubr.f32.gmra.mrb[0].mxu0 %v175
    %v328 = vpop.f32.mrb[0].mxu0
    %v329 = vadd.f32 %v135, %v328
    %v330 = vpop.f32.mrb[0].mxu0
    %331 = vmatprep.mubr.f32.mxu0 0.0
    %332 = vmatmul.mubr.f32.gmra.mrb[0].mxu0 %v178
    %v333 = vpop.f32.mrb[0].mxu0
    %v334 = vadd.f32 %v135, %v333
    %v335 = vpop.f32.mrb[0].mxu0
    %336 = vmatprep.mubr.f32.mxu0 0.0
    %337 = vmatmul.mubr.f32.gmra.mrb[0].mxu0 %v181
    %v338 = vpop.f32.mrb[0].mxu0
    %v339 = vadd.f32 %v135, %v338
    %v340 = vpop.f32.mrb[0].mxu0
    %341 = vmatprep.mubr.f32.mxu0 0.0
    %342 = vmatmul.mubr.f32.gmra.mrb[0].mxu0 %v184
    %v343 = vpop.f32.mrb[0].mxu0
    %v344 = vadd.f32 %v135, %v343
    %v345 = vpop.f32.mrb[0].mxu0
    %346 = vmatprep.mubr.f32.mxu0 0.0
    %347 = vmatmul.mubr.f32.gmra.mrb[0].mxu0 %v187
    %v348 = vpop.f32.mrb[0].mxu0
    %v349 = vadd.f32 %v135, %v348
    %v350 = vpop.f32.mrb[0].mxu0
    %351 = vmatprep.mubr.f32.mxu0 0.0
    %352 = vmatmul.mubr.f32.gmra.mrb[0].mxu0 %v190
    %v353 = vpop.f32.mrb[0].mxu0
    %v354 = vadd.f32 %v135, %v353
    %v355 = vpop.f32.mrb[0].mxu0
    %356 = vmatprep.mubr.f32.mxu0 0.0
    %357 = vmatmul.mubr.f32.gmra.mrb[0].mxu0 %v193
    %v358 = vpop.f32.mrb[0].mxu0
    %v359 = vadd.f32 %v135, %v358
    %v360 = vpop.f32.mrb[0].mxu0
    %361 = vmatprep.mubr.f32.mxu0 0.0
    %362 = vmatmul.mubr.f32.gmra.mrb[0].mxu0 %v196
    %v363 = vpop.f32.mrb[0].mxu0
    %v364 = vadd.f32 %v135, %v363
    %v365 = vpop.f32.mrb[0].mxu0
    %366 = vdwg.mxu0
    %v367 = vmax.f32 %v269, 0.0
    %v368 = vmax.f32 %v274, 0.0
    %v369 = vmax.f32 %v279, 0.0
    %v370 = vmax.f32 %v284, 0.0
    %v371 = vmax.f32 %v289, 0.0
    %v372 = vmax.f32 %v294, 0.0
    %v373 = vmax.f32 %v299, 0.0
    %v374 = vmax.f32 %v304, 0.0
    %v375 = vmax.f32 %v309, 0.0
    %v376 = vmax.f32 %v314, 0.0
    %v377 = vmax.f32 %v319, 0.0
    %v378 = vmax.f32 %v324, 0.0
    %v379 = vmax.f32 %v329, 0.0
    %v380 = vmax.f32 %v334, 0.0
    %v381 = vmax.f32 %v339, 0.0
    %v382 = vmax.f32 %v344, 0.0
    %v383 = vmax.f32 %v349, 0.0
    %v384 = vmax.f32 %v354, 0.0
    %v385 = vmax.f32 %v359, 0.0
    %v386 = vmax.f32 %v364, 0.0
    %v387 = vpack.c.bf16 %v368, %v367
    %v388 = vpack.c.bf16 %v370, %v369
    %v389 = vpack.c.bf16 %v372, %v371
    %v390 = vpack.c.bf16 %v374, %v373
    %v391 = vpack.c.bf16 %v376, %v375
    %v392 = vpack.c.bf16 %v378, %v377
    %v393 = vpack.c.bf16 %v380, %v379
    %v394 = vpack.c.bf16 %v382, %v381
    %v395 = vpack.c.bf16 %v384, %v383
    %v396 = vpack.c.bf16 %v386, %v385
    %v397 = vld [vmem:[%s5] sm:$0xf]
    %v398 = vld [vmem:[%s5 + $0x4] sm:$0xf]
    %v399 = vld [vmem:[%s5 + $0x8] sm:$0xf]
    %v400 = vld [vmem:[%s5 + $0xc] sm:$0xf]
    %v401 = vld [vmem:[%s6] sm:$0x1]
    %v403 = vlaneseq
    %v404 = vshrl.u32 %v403, 7
    %v405 = vsub.s32 0, %v404
    %v406 = vrot.slane %v401, %v405
    %v412 = vunpack.c.l.b16 %v397
    %v413 = vunpack.c.l.b16 %v398
    %v414 = vunpack.c.l.b16 %v399
    %v415 = vunpack.c.l.b16 %v400
    %v416 = vpack.c.b16 %v413, %v412
    %v417 = vpack.c.b16 %v415, %v414
    %vm420 = vcmask 261120
    %v422 = vsel %vm420, %v387, 0
    %v425 = vsel %vm420, %v388, 0
    %v428 = vsel %vm420, %v389, 0
    %v431 = vsel %vm420, %v390, 0
    %v434 = vsel %vm420, %v391, 0
    %v437 = vsel %vm420, %v392, 0
    %v440 = vsel %vm420, %v393, 0
    %v443 = vsel %vm420, %v394, 0
    %v446 = vsel %vm420, %v395, 0
    %v449 = vsel %vm420, %v396, 0
    %451 = vmatprep.subr.bf16.mxu0 0
    %452 = vmatpush1.bf16.msra.mxu0 %v416
    %453 = vmatprep.subr.bf16.mxu0 0
    %454 = vmatpush1.bf16.msra.mxu0 %v417
    %455 = vmatprep.subr.bf16.mxu0 0
    %456 = vmatpush1.bf16.msra.mxu0 0
    %457 = vmatprep.subr.bf16.mxu0 0
    %458 = vmatpush1.bf16.msra.mxu0 0
    %459 = vmatprep.subr.bf16.mxu0 0
    %460 = vmatpush1.bf16.msra.mxu0 0
    %461 = vmatprep.subr.bf16.mxu0 0
    %462 = vmatpush1.bf16.msra.mxu0 0
    %463 = vmatprep.subr.bf16.mxu0 0
    %464 = vmatpush1.bf16.msra.mxu0 0
    %465 = vmatprep.subr.bf16.mxu0 0
    %466 = vmatpush1.bf16.msra.mxu0 0
    %467 = vmatprep.subr.bf16.mxu0 0
    %468 = vmatpush1.bf16.msra.mxu0 0
    %469 = vmatprep.subr.bf16.mxu0 0
    %470 = vmatpush1.bf16.msra.mxu0 0
    %471 = vmatprep.subr.bf16.mxu0 0
    %472 = vmatpush1.bf16.msra.mxu0 0
    %473 = vmatprep.subr.bf16.mxu0 0
    %474 = vmatpush1.bf16.msra.mxu0 0
    %475 = vmatprep.subr.bf16.mxu0 0
    %476 = vmatpush1.bf16.msra.mxu0 0
    %477 = vmatprep.subr.bf16.mxu0 0
    %478 = vmatpush1.bf16.msra.mxu0 0
    %479 = vmatprep.subr.bf16.mxu0 0
    %480 = vmatpush1.bf16.msra.mxu0 0
    %481 = vmatprep.subr.bf16.mxu0 0
    %482 = vmatpush1.bf16.msra.mxu0 0
    %483 = vmatprep.mubr.bf16.mxu0 0
    %484 = vmatmul.mubr.bf16.gmra.mrb[0].mxu0 %v422
    %v485 = vpop.f32.mrb[0].mxu0
    %v486 = vadd.f32 %v406, %v485
    %v487 = vpop.f32.mrb[0].mxu0
    %v488 = vpop.f32.mrb[0].mxu0
    %v489 = vadd.f32 %v406, %v488
    %v490 = vpop.f32.mrb[0].mxu0
    %491 = vmatprep.mubr.bf16.mxu0 0
    %492 = vmatmul.mubr.bf16.gmra.mrb[0].mxu0 %v425
    %v493 = vpop.f32.mrb[0].mxu0
    %v494 = vadd.f32 %v406, %v493
    %v495 = vpop.f32.mrb[0].mxu0
    %v496 = vpop.f32.mrb[0].mxu0
    %v497 = vadd.f32 %v406, %v496
    %v498 = vpop.f32.mrb[0].mxu0
    %499 = vmatprep.mubr.bf16.mxu0 0
    %500 = vmatmul.mubr.bf16.gmra.mrb[0].mxu0 %v428
    %v501 = vpop.f32.mrb[0].mxu0
    %v502 = vadd.f32 %v406, %v501
    %v503 = vpop.f32.mrb[0].mxu0
    %v504 = vpop.f32.mrb[0].mxu0
    %v505 = vadd.f32 %v406, %v504
    %v506 = vpop.f32.mrb[0].mxu0
    %507 = vmatprep.mubr.bf16.mxu0 0
    %508 = vmatmul.mubr.bf16.gmra.mrb[0].mxu0 %v431
    %v509 = vpop.f32.mrb[0].mxu0
    %v510 = vadd.f32 %v406, %v509
    %v511 = vpop.f32.mrb[0].mxu0
    %v512 = vpop.f32.mrb[0].mxu0
    %v513 = vadd.f32 %v406, %v512
    %v514 = vpop.f32.mrb[0].mxu0
    %515 = vmatprep.mubr.bf16.mxu0 0
    %516 = vmatmul.mubr.bf16.gmra.mrb[0].mxu0 %v434
    %v517 = vpop.f32.mrb[0].mxu0
    %v518 = vadd.f32 %v406, %v517
    %v519 = vpop.f32.mrb[0].mxu0
    %v520 = vpop.f32.mrb[0].mxu0
    %v521 = vadd.f32 %v406, %v520
    %v522 = vpop.f32.mrb[0].mxu0
    %523 = vmatprep.mubr.bf16.mxu0 0
    %524 = vmatmul.mubr.bf16.gmra.mrb[0].mxu0 %v437
    %v525 = vpop.f32.mrb[0].mxu0
    %v526 = vadd.f32 %v406, %v525
    %v527 = vpop.f32.mrb[0].mxu0
    %v528 = vpop.f32.mrb[0].mxu0
    %v529 = vadd.f32 %v406, %v528
    %v530 = vpop.f32.mrb[0].mxu0
    %531 = vmatprep.mubr.bf16.mxu0 0
    %532 = vmatmul.mubr.bf16.gmra.mrb[0].mxu0 %v440
    %v533 = vpop.f32.mrb[0].mxu0
    %v534 = vadd.f32 %v406, %v533
    %v535 = vpop.f32.mrb[0].mxu0
    %v536 = vpop.f32.mrb[0].mxu0
    %v537 = vadd.f32 %v406, %v536
    %v538 = vpop.f32.mrb[0].mxu0
    %539 = vmatprep.mubr.bf16.mxu0 0
    %540 = vmatmul.mubr.bf16.gmra.mrb[0].mxu0 %v443
    %v541 = vpop.f32.mrb[0].mxu0
    %v542 = vadd.f32 %v406, %v541
    %v543 = vpop.f32.mrb[0].mxu0
    %v544 = vpop.f32.mrb[0].mxu0
    %v545 = vadd.f32 %v406, %v544
    %v546 = vpop.f32.mrb[0].mxu0
    %547 = vmatprep.mubr.bf16.mxu0 0
    %548 = vmatmul.mubr.bf16.gmra.mrb[0].mxu0 %v446
    %v549 = vpop.f32.mrb[0].mxu0
    %v550 = vadd.f32 %v406, %v549
    %v551 = vpop.f32.mrb[0].mxu0
    %v552 = vpop.f32.mrb[0].mxu0
    %v553 = vadd.f32 %v406, %v552
    %v554 = vpop.f32.mrb[0].mxu0
    %555 = vmatprep.mubr.bf16.mxu0 0
    %556 = vmatmul.mubr.bf16.gmra.mrb[0].mxu0 %v449
    %v557 = vpop.f32.mrb[0].mxu0
    %v558 = vadd.f32 %v406, %v557
    %v559 = vpop.f32.mrb[0].mxu0
    %v560 = vpop.f32.mrb[0].mxu0
    %v561 = vadd.f32 %v406, %v560
    %v562 = vpop.f32.mrb[0].mxu0
    %563 = vdwg.mxu0
    %s564 = smul.u32 0, 40
    %v565 = vlaneseq
    %v566 = vshrl.u32 %v565, 7
    %v567 = vadd.s32 %v566, 8
    %v568 = vadd.s32 %v566, 16
    %v569 = vadd.s32 %v566, 24
    %v570 = vadd.s32 %v566, 32
    %v571 = vstv %s564
    %v572 = vadd.s32 %v571, %v566
    %v573 = vadd.s32 %v571, %v567
    %v574 = vadd.s32 %v571, %v568
    %v575 = vadd.s32 %v571, %v569
    %v576 = vadd.s32 %v571, %v570
    %vm577 = vcmp.lt.s32.totalorder %v572, 32
    %vm578 = vcmp.lt.s32.totalorder %v573, 32
    %vm579 = vcmp.lt.s32.totalorder %v574, 32
    %vm580 = vcmp.lt.s32.totalorder %v575, 32
    %vm581 = vcmp.lt.s32.totalorder %v576, 32
    %v582 = vsel %vm577, 1, 0
    %v583 = vsel %vm578, 1, 0
    %v584 = vsel %vm579, 1, 0
    %v585 = vsel %vm580, 1, 0
    %v586 = vsel %vm581, 1, 0
    %v587 = vcvt.s32.f32 %v582
    %v588 = vcvt.s32.f32 %v583
    %v589 = vcvt.s32.f32 %v584
    %v590 = vcvt.s32.f32 %v585
    %v591 = vcvt.s32.f32 %v586
    %v592 = vld [vmem:[%s1] sm:$0xff]
    %v593 = vld [vmem:[%s1 + $0x8] sm:$0xff]
    %v594 = vld [vmem:[%s1 + $0x10] sm:$0xff]
    %v595 = vld [vmem:[%s1 + $0x18] sm:$0xff]
    %v596 = vld [vmem:[%s1 + $0x20] sm:$0xff]
    %v597 = vld [vmem:[%s7] sm:$0x1]
    %599 = vset.pattern.permute.xlu0 0
    %600 = vperm.xlu0 %599, %v592
    %v601 = vpop.permute.xlu0 %600
    %604 = vset.pattern.permute.xlu0 0
    %605 = vperm.xlu0 %604, %v593
    %v606 = vpop.permute.xlu0 %605
    %609 = vset.pattern.permute.xlu0 0
    %610 = vperm.xlu0 %609, %v594
    %v611 = vpop.permute.xlu0 %610
    %614 = vset.pattern.permute.xlu0 0
    %615 = vperm.xlu0 %614, %v595
    %v616 = vpop.permute.xlu0 %615
    %619 = vset.pattern.permute.xlu0 0
    %620 = vperm.xlu0 %619, %v596
    %v621 = vpop.permute.xlu0 %620
    %v624 = vlaneseq
    %v625 = vshrl.u32 %v624, 7
    %v626 = vsub.s32 0, %v625
    %v627 = vrot.slane %v597, %v626
    %v629 = vmul.f32 %v601, %v627
    %v630 = vmul.f32 %v606, %v627
    %v631 = vmul.f32 %v611, %v627
    %v632 = vmul.f32 %v616, %v627
    %v633 = vmul.f32 %v621, %v627
    %v634 = vld [vmem:[%s8] sm:$0x1]
    %v636 = vlaneseq
    %v637 = vshrl.u32 %v636, 7
    %v638 = vsub.s32 0, %v637
    %v639 = vrot.slane %v634, %v638
    %v641 = vadd.f32 %v629, %v639
    %v642 = vadd.f32 %v630, %v639
    %v643 = vadd.f32 %v631, %v639
    %v644 = vadd.f32 %v632, %v639
    %v645 = vadd.f32 %v633, %v639
    %v646 = vmul.f32 %v641, %v587
    %v647 = vmul.f32 %v642, %v588
    %v648 = vmul.f32 %v643, %v589
    %v649 = vmul.f32 %v644, %v590
    %v650 = vmul.f32 %v645, %v591
    %v651 = vadd.f32 %v486, %v646
    %v652 = vadd.f32 %v489, %v647
    %v653 = vadd.f32 %v494, %v648
    %v654 = vadd.f32 %v497, %v649
    %v655 = vadd.f32 %v502, %v650
    %v656 = vadd.f32 %v505, %v646
    %v657 = vadd.f32 %v510, %v647
    %v658 = vadd.f32 %v513, %v648
    %v659 = vadd.f32 %v518, %v649
    %v660 = vadd.f32 %v521, %v650
    %v661 = vadd.f32 %v526, %v646
    %v662 = vadd.f32 %v529, %v647
    %v663 = vadd.f32 %v534, %v648
    %v664 = vadd.f32 %v537, %v649
    %v665 = vadd.f32 %v542, %v650
    %v666 = vadd.f32 %v545, %v646
    %v667 = vadd.f32 %v550, %v647
    %v668 = vadd.f32 %v553, %v648
    %v669 = vadd.f32 %v558, %v649
    %v670 = vadd.f32 %v561, %v650
    %v671 = vpack.c.bf16 %v652, %v651
    %v672 = vpack.c.bf16 %v654, %v653
    %v673 = vpack.c.bf16 %v656, %v655
    %v674 = vpack.c.bf16 %v658, %v657
    %v675 = vpack.c.bf16 %v660, %v659
    %v676 = vpack.c.bf16 %v662, %v661
    %v677 = vpack.c.bf16 %v664, %v663
    %v678 = vpack.c.bf16 %v666, %v665
    %v679 = vpack.c.bf16 %v668, %v667
    %v680 = vpack.c.bf16 %v670, %v669
    %v681 = vld [vmem:[#allocation2] sm:$0xff]
    %v682 = vld [vmem:[#allocation2 + $0x8] sm:$0xf]
    %v683 = vld [vmem:[#allocation2 + $0xc] sm:$0xff]
    %v684 = vld [vmem:[#allocation2 + $0x14] sm:$0xf]
    %v685 = vld [vmem:[#allocation2 + $0x18] sm:$0xff]
    %v686 = vld [vmem:[#allocation2 + $0x20] sm:$0xf]
    %v687 = vld [vmem:[#allocation2 + $0x24] sm:$0xff]
    %v688 = vld [vmem:[#allocation2 + $0x2c] sm:$0xf]
    %v689 = vld [vmem:[#allocation2 + $0x30] sm:$0xff]
    %v690 = vld [vmem:[#allocation2 + $0x38] sm:$0xf]
    %v691 = vld [vmem:[#allocation2 + $0x3c] sm:$0xff]
    %v692 = vld [vmem:[#allocation2 + $0x44] sm:$0xf]
    %v693 = vld [vmem:[#allocation2 + $0x48] sm:$0xff]
    %v694 = vld [vmem:[#allocation2 + $0x50] sm:$0xf]
    %v695 = vld [vmem:[#allocation2 + $0x54] sm:$0xff]
    %v696 = vld [vmem:[#allocation2 + $0x5c] sm:$0xf]
    %v697 = vld [vmem:[#allocation2 + $0x60] sm:$0xff]
    %v698 = vld [vmem:[#allocation2 + $0x68] sm:$0xf]
    %v699 = vld [vmem:[#allocation2 + $0x6c] sm:$0xff]
    %v700 = vld [vmem:[#allocation2 + $0x74] sm:$0xf]
    %v701 = vld [vmem:[#allocation2 + $0x78] sm:$0xff]
    %v702 = vld [vmem:[#allocation2 + $0x80] sm:$0xf]
    %v703 = vld [vmem:[#allocation2 + $0x84] sm:$0xff]
    %v704 = vld [vmem:[#allocation2 + $0x8c] sm:$0xf]
    %v705 = vld [vmem:[#allocation2 + $0x90] sm:$0xff]
    %v706 = vld [vmem:[#allocation2 + $0x98] sm:$0xf]
    %v707 = vld [vmem:[#allocation2 + $0x9c] sm:$0xff]
    %v708 = vld [vmem:[#allocation2 + $0xa4] sm:$0xf]
    %v709 = vld [vmem:[#allocation2 + $0xa8] sm:$0xff]
    %v710 = vld [vmem:[#allocation2 + $0xb0] sm:$0xf]
    %v711 = vld [vmem:[#allocation2 + $0xb4] sm:$0xff]
    %v712 = vld [vmem:[#allocation2 + $0xbc] sm:$0xf]
    %v745 = vunpack.c.l.b16 %v681
    %v746 = vunpack.c.h.b16 %v681
    %v747 = vunpack.c.l.b16 %v682
    %v748 = vunpack.c.l.b16 %v683
    %v749 = vunpack.c.h.b16 %v683
    %v750 = vunpack.c.l.b16 %v684
    %v751 = vunpack.c.l.b16 %v685
    %v752 = vunpack.c.h.b16 %v685
    %v753 = vunpack.c.l.b16 %v686
    %v754 = vunpack.c.l.b16 %v687
    %v755 = vunpack.c.h.b16 %v687
    %v756 = vunpack.c.l.b16 %v688
    %v757 = vunpack.c.l.b16 %v689
    %v758 = vunpack.c.h.b16 %v689
    %v759 = vunpack.c.l.b16 %v690
    %v760 = vunpack.c.l.b16 %v691
    %v761 = vunpack.c.h.b16 %v691
    %v762 = vunpack.c.l.b16 %v692
    %v763 = vunpack.c.l.b16 %v693
    %v764 = vunpack.c.h.b16 %v693
    %v765 = vunpack.c.l.b16 %v694
    %v766 = vunpack.c.l.b16 %v695
    %v767 = vunpack.c.h.b16 %v695
    %v768 = vunpack.c.l.b16 %v696
    %v769 = vunpack.c.l.b16 %v697
    %v770 = vunpack.c.h.b16 %v697
    %v771 = vunpack.c.l.b16 %v698
    %v772 = vunpack.c.l.b16 %v699
    %v773 = vunpack.c.h.b16 %v699
    %v774 = vunpack.c.l.b16 %v700
    %v775 = vunpack.c.l.b16 %v701
    %v776 = vunpack.c.h.b16 %v701
    %v777 = vunpack.c.l.b16 %v702
    %v778 = vunpack.c.l.b16 %v703
    %v779 = vunpack.c.h.b16 %v703
    %v780 = vunpack.c.l.b16 %v704
    %v781 = vunpack.c.l.b16 %v705
    %v782 = vunpack.c.h.b16 %v705
    %v783 = vunpack.c.l.b16 %v706
    %v784 = vunpack.c.l.b16 %v707
    %v785 = vunpack.c.h.b16 %v707
    %v786 = vunpack.c.l.b16 %v708
    %v787 = vunpack.c.l.b16 %v709
    %v788 = vunpack.c.h.b16 %v709
    %v789 = vunpack.c.l.b16 %v710
    %v790 = vunpack.c.l.b16 %v711
    %v791 = vunpack.c.h.b16 %v711
    %v792 = vunpack.c.l.b16 %v712
    %v793 = vpack.c.b16 %v748, %v745
    %v794 = vpack.c.b16 %v749, %v746
    %v795 = vpack.c.b16 %v750, %v747
    %v796 = vpack.c.b16 %v754, %v751
    %v797 = vpack.c.b16 %v755, %v752
    %v798 = vpack.c.b16 %v756, %v753
    %v799 = vpack.c.b16 %v760, %v757
    %v800 = vpack.c.b16 %v761, %v758
    %v801 = vpack.c.b16 %v762, %v759
    %v802 = vpack.c.b16 %v766, %v763
    %v803 = vpack.c.b16 %v767, %v764
    %v804 = vpack.c.b16 %v768, %v765
    %v805 = vpack.c.b16 %v772, %v769
    %v806 = vpack.c.b16 %v773, %v770
    %v807 = vpack.c.b16 %v774, %v771
    %v808 = vpack.c.b16 %v778, %v775
    %v809 = vpack.c.b16 %v779, %v776
    %v810 = vpack.c.b16 %v780, %v777
    %v811 = vpack.c.b16 %v784, %v781
    %v812 = vpack.c.b16 %v785, %v782
    %v813 = vpack.c.b16 %v786, %v783
    %v814 = vpack.c.b16 %v790, %v787
    %v815 = vpack.c.b16 %v791, %v788
    %v816 = vpack.c.b16 %v792, %v789
    %841 = vmatprep.subr.bf16.mxu0 %v794
    %842 = vmatpush1.bf16.msra.mxu0 %v793
    %843 = vmatprep.subr.bf16.mxu0 %v797
    %844 = vmatpush1.bf16.msra.mxu0 %v796
    %845 = vmatprep.subr.bf16.mxu0 %v800
    %846 = vmatpush1.bf16.msra.mxu0 %v799
    %847 = vmatprep.subr.bf16.mxu0 %v803
    %848 = vmatpush1.bf16.msra.mxu0 %v802
    %849 = vmatprep.subr.bf16.mxu0 %v806
    %850 = vmatpush1.bf16.msra.mxu0 %v805
    %851 = vmatprep.subr.bf16.mxu0 %v809
    %852 = vmatpush1.bf16.msra.mxu0 %v808
    %853 = vmatprep.subr.bf16.mxu0 %v812
    %854 = vmatpush1.bf16.msra.mxu0 %v811
    %855 = vmatprep.subr.bf16.mxu0 %v815
    %856 = vmatpush1.bf16.msra.mxu0 %v814
    %857 = vmatprep.subr.bf16.mxu0 0
    %858 = vmatpush1.bf16.msra.mxu0 0
    %859 = vmatprep.subr.bf16.mxu0 0
    %860 = vmatpush1.bf16.msra.mxu0 0
    %861 = vmatprep.subr.bf16.mxu0 0
    %862 = vmatpush1.bf16.msra.mxu0 0
    %863 = vmatprep.subr.bf16.mxu0 0
    %864 = vmatpush1.bf16.msra.mxu0 0
    %865 = vmatprep.subr.bf16.mxu0 0
    %866 = vmatpush1.bf16.msra.mxu0 0
    %867 = vmatprep.subr.bf16.mxu0 0
    %868 = vmatpush1.bf16.msra.mxu0 0
    %869 = vmatprep.subr.bf16.mxu0 0
    %870 = vmatpush1.bf16.msra.mxu0 0
    %871 = vmatprep.subr.bf16.mxu0 0
    %872 = vmatpush1.bf16.msra.mxu0 0
    %873 = vmatprep.mubr.bf16.mxu0 0
    %874 = vmatmul.mubr.bf16.gmra.mrb[0].mxu0 %v671
    %v875 = vpop.f32.mrb[0].mxu0
    %v876 = vadd.f32 0.0, %v875
    %v877 = vpop.f32.mrb[0].mxu0
    %v878 = vadd.f32 0.0, %v877
    %v879 = vpop.f32.mrb[0].mxu0
    %v880 = vadd.f32 0.0, %v879
    %v881 = vpop.f32.mrb[0].mxu0
    %v882 = vadd.f32 0.0, %v881
    %883 = vmatprep.mubr.bf16.mxu0 0
    %884 = vmatmul.mubr.bf16.gmra.mrb[0].mxu0 %v672
    %v885 = vpop.f32.mrb[0].mxu0
    %v886 = vadd.f32 0.0, %v885
    %v887 = vpop.f32.mrb[0].mxu0
    %v888 = vadd.f32 0.0, %v887
    %v889 = vpop.f32.mrb[0].mxu0
    %v890 = vadd.f32 0.0, %v889
    %v891 = vpop.f32.mrb[0].mxu0
    %v892 = vadd.f32 0.0, %v891
    %893 = vmatprep.mubr.bf16.mxu0 0
    %894 = vmatmul.mubr.bf16.gmra.mrb[0].mxu0 %v673
    %v895 = vpop.f32.mrb[0].mxu0
    %v896 = vadd.f32 0.0, %v895
    %v897 = vpop.f32.mrb[0].mxu0
    %v898 = vadd.f32 0.0, %v897
    %v899 = vpop.f32.mrb[0].mxu0
    %v900 = vadd.f32 0.0, %v899
    %v901 = vpop.f32.mrb[0].mxu0
    %v902 = vadd.f32 0.0, %v901
    %903 = vmatprep.mubr.bf16.mxu0 0
    %904 = vmatmul.mubr.bf16.gmra.mrb[0].mxu0 %v674
    %v905 = vpop.f32.mrb[0].mxu0
    %v906 = vadd.f32 0.0, %v905
    %v907 = vpop.f32.mrb[0].mxu0
    %v908 = vadd.f32 0.0, %v907
    %v909 = vpop.f32.mrb[0].mxu0
    %v910 = vadd.f32 0.0, %v909
    %v911 = vpop.f32.mrb[0].mxu0
    %v912 = vadd.f32 0.0, %v911
    %913 = vmatprep.mubr.bf16.mxu0 0
    %914 = vmatmul.mubr.bf16.gmra.mrb[0].mxu0 %v675
    %v915 = vpop.f32.mrb[0].mxu0
    %v916 = vadd.f32 0.0, %v915
    %v917 = vpop.f32.mrb[0].mxu0
    %v918 = vadd.f32 0.0, %v917
    %v919 = vpop.f32.mrb[0].mxu0
    %v920 = vadd.f32 0.0, %v919
    %v921 = vpop.f32.mrb[0].mxu0
    %v922 = vadd.f32 0.0, %v921
    %923 = vmatprep.mubr.bf16.mxu0 0
    %924 = vmatmul.mubr.bf16.gmra.mrb[0].mxu0 %v676
    %v925 = vpop.f32.mrb[0].mxu0
    %v926 = vadd.f32 0.0, %v925
    %v927 = vpop.f32.mrb[0].mxu0
    %v928 = vadd.f32 0.0, %v927
    %v929 = vpop.f32.mrb[0].mxu0
    %v930 = vadd.f32 0.0, %v929
    %v931 = vpop.f32.mrb[0].mxu0
    %v932 = vadd.f32 0.0, %v931
    %933 = vmatprep.mubr.bf16.mxu0 0
    %934 = vmatmul.mubr.bf16.gmra.mrb[0].mxu0 %v677
    %v935 = vpop.f32.mrb[0].mxu0
    %v936 = vadd.f32 0.0, %v935
    %v937 = vpop.f32.mrb[0].mxu0
    %v938 = vadd.f32 0.0, %v937
    %v939 = vpop.f32.mrb[0].mxu0
    %v940 = vadd.f32 0.0, %v939
    %v941 = vpop.f32.mrb[0].mxu0
    %v942 = vadd.f32 0.0, %v941
    %943 = vmatprep.mubr.bf16.mxu0 0
    %944 = vmatmul.mubr.bf16.gmra.mrb[0].mxu0 %v678
    %v945 = vpop.f32.mrb[0].mxu0
    %v946 = vadd.f32 0.0, %v945
    %v947 = vpop.f32.mrb[0].mxu0
    %v948 = vadd.f32 0.0, %v947
    %v949 = vpop.f32.mrb[0].mxu0
    %v950 = vadd.f32 0.0, %v949
    %v951 = vpop.f32.mrb[0].mxu0
    %v952 = vadd.f32 0.0, %v951
    %953 = vmatprep.mubr.bf16.mxu0 0
    %954 = vmatmul.mubr.bf16.gmra.mrb[0].mxu0 %v679
    %v955 = vpop.f32.mrb[0].mxu0
    %v956 = vadd.f32 0.0, %v955
    %v957 = vpop.f32.mrb[0].mxu0
    %v958 = vadd.f32 0.0, %v957
    %v959 = vpop.f32.mrb[0].mxu0
    %v960 = vadd.f32 0.0, %v959
    %v961 = vpop.f32.mrb[0].mxu0
    %v962 = vadd.f32 0.0, %v961
    %963 = vmatprep.mubr.bf16.mxu0 0
    %964 = vmatmul.mubr.bf16.gmra.mrb[0].mxu0 %v680
    %v965 = vpop.f32.mrb[0].mxu0
    %v966 = vadd.f32 0.0, %v965
    %v967 = vpop.f32.mrb[0].mxu0
    %v968 = vadd.f32 0.0, %v967
    %v969 = vpop.f32.mrb[0].mxu0
    %v970 = vadd.f32 0.0, %v969
    %v971 = vpop.f32.mrb[0].mxu0
    %v972 = vadd.f32 0.0, %v971
    %973 = vdwg.mxu0
    %974 = vmatprep.subr.bf16.mxu0 0
    %975 = vmatpush1.bf16.msra.mxu0 %v795
    %976 = vmatprep.subr.bf16.mxu0 0
    %977 = vmatpush1.bf16.msra.mxu0 %v798
    %978 = vmatprep.subr.bf16.mxu0 0
    %979 = vmatpush1.bf16.msra.mxu0 %v801
    %980 = vmatprep.subr.bf16.mxu0 0
    %981 = vmatpush1.bf16.msra.mxu0 %v804
    %982 = vmatprep.subr.bf16.mxu0 0
    %983 = vmatpush1.bf16.msra.mxu0 %v807
    %984 = vmatprep.subr.bf16.mxu0 0
    %985 = vmatpush1.bf16.msra.mxu0 %v810
    %986 = vmatprep.subr.bf16.mxu0 0
    %987 = vmatpush1.bf16.msra.mxu0 %v813
    %988 = vmatprep.subr.bf16.mxu0 0
    %989 = vmatpush1.bf16.msra.mxu0 %v816
    %990 = vmatprep.subr.bf16.mxu0 0
    %991 = vmatpush1.bf16.msra.mxu0 0
    %992 = vmatprep.subr.bf16.mxu0 0
    %993 = vmatpush1.bf16.msra.mxu0 0
    %994 = vmatprep.subr.bf16.mxu0 0
    %995 = vmatpush1.bf16.msra.mxu0 0
    %996 = vmatprep.subr.bf16.mxu0 0
    %997 = vmatpush1.bf16.msra.mxu0 0
    %998 = vmatprep.subr.bf16.mxu0 0
    %999 = vmatpush1.bf16.msra.mxu0 0
    %1000 = vmatprep.subr.bf16.mxu0 0
    %1001 = vmatpush1.bf16.msra.mxu0 0
    %1002 = vmatprep.subr.bf16.mxu0 0
    %1003 = vmatpush1.bf16.msra.mxu0 0
    %1004 = vmatprep.subr.bf16.mxu0 0
    %1005 = vmatpush1.bf16.msra.mxu0 0
    %1006 = vmatprep.mubr.bf16.mxu0 0
    %1007 = vmatmul.mubr.bf16.gmra.mrb[0].mxu0 %v671
    %v1008 = vpop.f32.mrb[0].mxu0
    %v1009 = vadd.f32 0.0, %v1008
    %v1010 = vpop.f32.mrb[0].mxu0
    %v1011 = vpop.f32.mrb[0].mxu0
    %v1012 = vadd.f32 0.0, %v1011
    %v1013 = vpop.f32.mrb[0].mxu0
    %1014 = vmatprep.mubr.bf16.mxu0 0
    %1015 = vmatmul.mubr.bf16.gmra.mrb[0].mxu0 %v672
    %v1016 = vpop.f32.mrb[0].mxu0
    %v1017 = vadd.f32 0.0, %v1016
    %v1018 = vpop.f32.mrb[0].mxu0
    %v1019 = vpop.f32.mrb[0].mxu0
    %v1020 = vadd.f32 0.0, %v1019
    %v1021 = vpop.f32.mrb[0].mxu0
    %1022 = vmatprep.mubr.bf16.mxu0 0
    %1023 = vmatmul.mubr.bf16.gmra.mrb[0].mxu0 %v673
    %v1024 = vpop.f32.mrb[0].mxu0
    %v1025 = vadd.f32 0.0, %v1024
    %v1026 = vpop.f32.mrb[0].mxu0
    %v1027 = vpop.f32.mrb[0].mxu0
    %v1028 = vadd.f32 0.0, %v1027
    %v1029 = vpop.f32.mrb[0].mxu0
    %1030 = vmatprep.mubr.bf16.mxu0 0
    %1031 = vmatmul.mubr.bf16.gmra.mrb[0].mxu0 %v674
    %v1032 = vpop.f32.mrb[0].mxu0
    %v1033 = vadd.f32 0.0, %v1032
    %v1034 = vpop.f32.mrb[0].mxu0
    %v1035 = vpop.f32.mrb[0].mxu0
    %v1036 = vadd.f32 0.0, %v1035
    %v1037 = vpop.f32.mrb[0].mxu0
    %1038 = vmatprep.mubr.bf16.mxu0 0
    %1039 = vmatmul.mubr.bf16.gmra.mrb[0].mxu0 %v675
    %v1040 = vpop.f32.mrb[0].mxu0
    %v1041 = vadd.f32 0.0, %v1040
    %v1042 = vpop.f32.mrb[0].mxu0
    %v1043 = vpop.f32.mrb[0].mxu0
    %v1044 = vadd.f32 0.0, %v1043
    %v1045 = vpop.f32.mrb[0].mxu0
    %1046 = vmatprep.mubr.bf16.mxu0 0
    %1047 = vmatmul.mubr.bf16.gmra.mrb[0].mxu0 %v676
    %v1048 = vpop.f32.mrb[0].mxu0
    %v1049 = vadd.f32 0.0, %v1048
    %v1050 = vpop.f32.mrb[0].mxu0
    %v1051 = vpop.f32.mrb[0].mxu0
    %v1052 = vadd.f32 0.0, %v1051
    %v1053 = vpop.f32.mrb[0].mxu0
    %1054 = vmatprep.mubr.bf16.mxu0 0
    %1055 = vmatmul.mubr.bf16.gmra.mrb[0].mxu0 %v677
    %v1056 = vpop.f32.mrb[0].mxu0
    %v1057 = vadd.f32 0.0, %v1056
    %v1058 = vpop.f32.mrb[0].mxu0
    %v1059 = vpop.f32.mrb[0].mxu0
    %v1060 = vadd.f32 0.0, %v1059
    %v1061 = vpop.f32.mrb[0].mxu0
    %1062 = vmatprep.mubr.bf16.mxu0 0
    %1063 = vmatmul.mubr.bf16.gmra.mrb[0].mxu0 %v678
    %v1064 = vpop.f32.mrb[0].mxu0
    %v1065 = vadd.f32 0.0, %v1064
    %v1066 = vpop.f32.mrb[0].mxu0
    %v1067 = vpop.f32.mrb[0].mxu0
    %v1068 = vadd.f32 0.0, %v1067
    %v1069 = vpop.f32.mrb[0].mxu0
    %1070 = vmatprep.mubr.bf16.mxu0 0
    %1071 = vmatmul.mubr.bf16.gmra.mrb[0].mxu0 %v679
    %v1072 = vpop.f32.mrb[0].mxu0
    %v1073 = vadd.f32 0.0, %v1072
    %v1074 = vpop.f32.mrb[0].mxu0
    %v1075 = vpop.f32.mrb[0].mxu0
    %v1076 = vadd.f32 0.0, %v1075
    %v1077 = vpop.f32.mrb[0].mxu0
    %1078 = vmatprep.mubr.bf16.mxu0 0
    %1079 = vmatmul.mubr.bf16.gmra.mrb[0].mxu0 %v680
    %v1080 = vpop.f32.mrb[0].mxu0
    %v1081 = vadd.f32 0.0, %v1080
    %v1082 = vpop.f32.mrb[0].mxu0
    %v1083 = vpop.f32.mrb[0].mxu0
    %v1084 = vadd.f32 0.0, %v1083
    %v1085 = vpop.f32.mrb[0].mxu0
    %1086 = vdwg.mxu0
    %1087 = vst [vmem:[#allocation5] sm:$0xff] %v651
    %1088 = vst [vmem:[#allocation5 + $0x8] sm:$0xff] %v652
    %1089 = vst [vmem:[#allocation5 + $0x10] sm:$0xff] %v653
    %1090 = vst [vmem:[#allocation5 + $0x18] sm:$0xff] %v654
    %1091 = vst [vmem:[#allocation5 + $0x20] sm:$0xff] %v655
    %1092 = vst [vmem:[#allocation5 + $0x28] sm:$0xff] %v656
    %1093 = vst [vmem:[#allocation5 + $0x30] sm:$0xff] %v657
    %1094 = vst [vmem:[#allocation5 + $0x38] sm:$0xff] %v658
    %1095 = vst [vmem:[#allocation5 + $0x40] sm:$0xff] %v659
    %1096 = vst [vmem:[#allocation5 + $0x48] sm:$0xff] %v660
    %1097 = vst [vmem:[#allocation5 + $0x50] sm:$0xff] %v661
    %1098 = vst [vmem:[#allocation5 + $0x58] sm:$0xff] %v662
    %1099 = vst [vmem:[#allocation5 + $0x60] sm:$0xff] %v663
    %1100 = vst [vmem:[#allocation5 + $0x68] sm:$0xff] %v664
    %1101 = vst [vmem:[#allocation5 + $0x70] sm:$0xff] %v665
    %1102 = vst [vmem:[#allocation5 + $0x78] sm:$0xff] %v666
    %1103 = vst [vmem:[#allocation5 + $0x80] sm:$0xff] %v667
    %1104 = vst [vmem:[#allocation5 + $0x88] sm:$0xff] %v668
    %1105 = vst [vmem:[#allocation5 + $0x90] sm:$0xff] %v669
    %1106 = vst [vmem:[#allocation5 + $0x98] sm:$0xff] %v670
    %v1107 = vpack.c.bf16 %v880, %v876
    %v1108 = vpack.c.bf16 %v890, %v886
    %v1109 = vpack.c.bf16 %v896, %v896
    %v1110 = vpack.c.bf16 %v906, %v900
    %v1111 = vpack.c.bf16 %v916, %v910
    %v1112 = vpack.c.bf16 %v920, %v920
    %v1113 = vpack.c.bf16 %v930, %v926
    %v1114 = vpack.c.bf16 %v940, %v936
    %v1115 = vpack.c.bf16 %v946, %v946
    %v1116 = vpack.c.bf16 %v956, %v950
    %v1117 = vpack.c.bf16 %v966, %v960
    %v1118 = vpack.c.bf16 %v970, %v970
    %v1131 = vunpack.c.l.b16 %v1107
    %v1132 = vunpack.c.h.b16 %v1107
    %v1133 = vunpack.c.l.b16 %v1108
    %v1134 = vunpack.c.h.b16 %v1108
    %v1135 = vunpack.c.l.b16 %v1109
    %v1136 = vunpack.c.l.b16 %v1110
    %v1137 = vunpack.c.h.b16 %v1110
    %v1138 = vunpack.c.l.b16 %v1111
    %v1139 = vunpack.c.h.b16 %v1111
    %v1140 = vunpack.c.l.b16 %v1112
    %v1141 = vunpack.c.l.b16 %v1113
    %v1142 = vunpack.c.h.b16 %v1113
    %v1143 = vunpack.c.l.b16 %v1114
    %v1144 = vunpack.c.h.b16 %v1114
    %v1145 = vunpack.c.l.b16 %v1115
    %v1146 = vunpack.c.l.b16 %v1116
    %v1147 = vunpack.c.h.b16 %v1116
    %v1148 = vunpack.c.l.b16 %v1117
    %v1149 = vunpack.c.h.b16 %v1117
    %v1150 = vunpack.c.l.b16 %v1118
    %v1151 = vpack.c.b16 %v1131, %v1131
    %v1152 = vpack.c.b16 %v1132, %v1132
    %v1153 = vpack.c.b16 %v1133, %v1133
    %v1154 = vpack.c.b16 %v1134, %v1134
    %v1155 = vpack.c.b16 %v1135, %v1135
    %v1156 = vpack.c.b16 %v1136, %v1136
    %v1157 = vpack.c.b16 %v1137, %v1137
    %v1158 = vpack.c.b16 %v1138, %v1138
    %v1159 = vpack.c.b16 %v1139, %v1139
    %v1160 = vpack.c.b16 %v1140, %v1140
    %v1161 = vpack.c.b16 %v1141, %v1141
    %v1162 = vpack.c.b16 %v1142, %v1142
    %v1163 = vpack.c.b16 %v1143, %v1143
    %v1164 = vpack.c.b16 %v1144, %v1144
    %v1165 = vpack.c.b16 %v1145, %v1145
    %v1166 = vpack.c.b16 %v1146, %v1146
    %v1167 = vpack.c.b16 %v1147, %v1147
    %v1168 = vpack.c.b16 %v1148, %v1148
    %v1169 = vpack.c.b16 %v1149, %v1149
    %v1170 = vpack.c.b16 %v1150, %v1150
    %1191 = vst [vmem:[#allocation6] sm:$0xf] %v1151
    %1192 = vst [vmem:[#allocation6 + $0x4] sm:$0xf] %v1152
    %1193 = vst [vmem:[#allocation6 + $0x8] sm:$0xf] %v1153
    %1194 = vst [vmem:[#allocation6 + $0xc] sm:$0xf] %v1154
    %1195 = vst [vmem:[#allocation6 + $0x10] sm:$0xf] %v1155
    %1196 = vst [vmem:[#allocation6 + $0x14] sm:$0xf] %v1156
    %1197 = vst [vmem:[#allocation6 + $0x18] sm:$0xf] %v1157
    %1198 = vst [vmem:[#allocation6 + $0x1c] sm:$0xf] %v1158
    %1199 = vst [vmem:[#allocation6 + $0x20] sm:$0xf] %v1159
    %1200 = vst [vmem:[#allocation6 + $0x24] sm:$0xf] %v1160
    %1201 = vst [vmem:[#allocation6 + $0x28] sm:$0xf] %v1161
    %1202 = vst [vmem:[#allocation6 + $0x2c] sm:$0xf] %v1162
    %1203 = vst [vmem:[#allocation6 + $0x30] sm:$0xf] %v1163
    %1204 = vst [vmem:[#allocation6 + $0x34] sm:$0xf] %v1164
    %1205 = vst [vmem:[#allocation6 + $0x38] sm:$0xf] %v1165
    %1206 = vst [vmem:[#allocation6 + $0x3c] sm:$0xf] %v1166
    %1207 = vst [vmem:[#allocation6 + $0x40] sm:$0xf] %v1167
    %1208 = vst [vmem:[#allocation6 + $0x44] sm:$0xf] %v1168
    %1209 = vst [vmem:[#allocation6 + $0x48] sm:$0xf] %v1169
    %1210 = vst [vmem:[#allocation6 + $0x4c] sm:$0xf] %v1170
    %v1211 = vpack.c.bf16 %v882, %v878
    %v1212 = vpack.c.bf16 %v892, %v888
    %v1213 = vpack.c.bf16 %v898, %v898
    %v1214 = vpack.c.bf16 %v908, %v902
    %v1215 = vpack.c.bf16 %v918, %v912
    %v1216 = vpack.c.bf16 %v922, %v922
    %v1217 = vpack.c.bf16 %v932, %v928
    %v1218 = vpack.c.bf16 %v942, %v938
    %v1219 = vpack.c.bf16 %v948, %v948
    %v1220 = vpack.c.bf16 %v958, %v952
    %v1221 = vpack.c.bf16 %v968, %v962
    %v1222 = vpack.c.bf16 %v972, %v972
    %v1235 = vunpack.c.l.b16 %v1211
    %v1236 = vunpack.c.h.b16 %v1211
    %v1237 = vunpack.c.l.b16 %v1212
    %v1238 = vunpack.c.h.b16 %v1212
    %v1239 = vunpack.c.l.b16 %v1213
    %v1240 = vunpack.c.l.b16 %v1214
    %v1241 = vunpack.c.h.b16 %v1214
    %v1242 = vunpack.c.l.b16 %v1215
    %v1243 = vunpack.c.h.b16 %v1215
    %v1244 = vunpack.c.l.b16 %v1216
    %v1245 = vunpack.c.l.b16 %v1217
    %v1246 = vunpack.c.h.b16 %v1217
    %v1247 = vunpack.c.l.b16 %v1218
    %v1248 = vunpack.c.h.b16 %v1218
    %v1249 = vunpack.c.l.b16 %v1219
    %v1250 = vunpack.c.l.b16 %v1220
    %v1251 = vunpack.c.h.b16 %v1220
    %v1252 = vunpack.c.l.b16 %v1221
    %v1253 = vunpack.c.h.b16 %v1221
    %v1254 = vunpack.c.l.b16 %v1222
    %v1255 = vpack.c.b16 %v1235, %v1235
    %v1256 = vpack.c.b16 %v1236, %v1236
    %v1257 = vpack.c.b16 %v1237, %v1237
    %v1258 = vpack.c.b16 %v1238, %v1238
    %v1259 = vpack.c.b16 %v1239, %v1239
    %v1260 = vpack.c.b16 %v1240, %v1240
    %v1261 = vpack.c.b16 %v1241, %v1241
    %v1262 = vpack.c.b16 %v1242, %v1242
    %v1263 = vpack.c.b16 %v1243, %v1243
    %v1264 = vpack.c.b16 %v1244, %v1244
    %v1265 = vpack.c.b16 %v1245, %v1245
    %v1266 = vpack.c.b16 %v1246, %v1246
    %v1267 = vpack.c.b16 %v1247, %v1247
    %v1268 = vpack.c.b16 %v1248, %v1248
    %v1269 = vpack.c.b16 %v1249, %v1249
    %v1270 = vpack.c.b16 %v1250, %v1250
    %v1271 = vpack.c.b16 %v1251, %v1251
    %v1272 = vpack.c.b16 %v1252, %v1252
    %v1273 = vpack.c.b16 %v1253, %v1253
    %v1274 = vpack.c.b16 %v1254, %v1254
    %1295 = vst [vmem:[#allocation8] sm:$0xf] %v1255
    %1296 = vst [vmem:[#allocation8 + $0x4] sm:$0xf] %v1256
    %1297 = vst [vmem:[#allocation8 + $0x8] sm:$0xf] %v1257
    %1298 = vst [vmem:[#allocation8 + $0xc] sm:$0xf] %v1258
    %1299 = vst [vmem:[#allocation8 + $0x10] sm:$0xf] %v1259
    %1300 = vst [vmem:[#allocation8 + $0x14] sm:$0xf] %v1260
    %1301 = vst [vmem:[#allocation8 + $0x18] sm:$0xf] %v1261
    %1302 = vst [vmem:[#allocation8 + $0x1c] sm:$0xf] %v1262
    %1303 = vst [vmem:[#allocation8 + $0x20] sm:$0xf] %v1263
    %1304 = vst [vmem:[#allocation8 + $0x24] sm:$0xf] %v1264
    %1305 = vst [vmem:[#allocation8 + $0x28] sm:$0xf] %v1265
    %1306 = vst [vmem:[#allocation8 + $0x2c] sm:$0xf] %v1266
    %1307 = vst [vmem:[#allocation8 + $0x30] sm:$0xf] %v1267
    %1308 = vst [vmem:[#allocation8 + $0x34] sm:$0xf] %v1268
    %1309 = vst [vmem:[#allocation8 + $0x38] sm:$0xf] %v1269
    %1310 = vst [vmem:[#allocation8 + $0x3c] sm:$0xf] %v1270
    %1311 = vst [vmem:[#allocation8 + $0x40] sm:$0xf] %v1271
    %1312 = vst [vmem:[#allocation8 + $0x44] sm:$0xf] %v1272
    %1313 = vst [vmem:[#allocation8 + $0x48] sm:$0xf] %v1273
    %1314 = vst [vmem:[#allocation8 + $0x4c] sm:$0xf] %v1274
    %v1315 = vpack.c.bf16 %v1012, %v1009
    %v1316 = vpack.c.bf16 %v1020, %v1017
    %v1317 = vpack.c.bf16 %v1025, %v1025
    %v1318 = vpack.c.bf16 %v1033, %v1028
    %v1319 = vpack.c.bf16 %v1041, %v1036
    %v1320 = vpack.c.bf16 %v1044, %v1044
    %v1321 = vpack.c.bf16 %v1052, %v1049
    %v1322 = vpack.c.bf16 %v1060, %v1057
    %v1323 = vpack.c.bf16 %v1065, %v1065
    %v1324 = vpack.c.bf16 %v1073, %v1068
    %v1325 = vpack.c.bf16 %v1081, %v1076
    %v1326 = vpack.c.bf16 %v1084, %v1084
    %v1339 = vunpack.c.l.b16 %v1315
    %v1340 = vunpack.c.h.b16 %v1315
    %v1341 = vunpack.c.l.b16 %v1316
    %v1342 = vunpack.c.h.b16 %v1316
    %v1343 = vunpack.c.l.b16 %v1317
    %v1344 = vunpack.c.l.b16 %v1318
    %v1345 = vunpack.c.h.b16 %v1318
    %v1346 = vunpack.c.l.b16 %v1319
    %v1347 = vunpack.c.h.b16 %v1319
    %v1348 = vunpack.c.l.b16 %v1320
    %v1349 = vunpack.c.l.b16 %v1321
    %v1350 = vunpack.c.h.b16 %v1321
    %v1351 = vunpack.c.l.b16 %v1322
    %v1352 = vunpack.c.h.b16 %v1322
    %v1353 = vunpack.c.l.b16 %v1323
    %v1354 = vunpack.c.l.b16 %v1324
    %v1355 = vunpack.c.h.b16 %v1324
    %v1356 = vunpack.c.l.b16 %v1325
    %v1357 = vunpack.c.h.b16 %v1325
    %v1358 = vunpack.c.l.b16 %v1326
    %v1359 = vpack.c.b16 %v1339, %v1339
    %v1360 = vpack.c.b16 %v1340, %v1340
    %v1361 = vpack.c.b16 %v1341, %v1341
    %v1362 = vpack.c.b16 %v1342, %v1342
    %v1363 = vpack.c.b16 %v1343, %v1343
    %v1364 = vpack.c.b16 %v1344, %v1344
    %v1365 = vpack.c.b16 %v1345, %v1345
    %v1366 = vpack.c.b16 %v1346, %v1346
    %v1367 = vpack.c.b16 %v1347, %v1347
    %v1368 = vpack.c.b16 %v1348, %v1348
    %v1369 = vpack.c.b16 %v1349, %v1349
    %v1370 = vpack.c.b16 %v1350, %v1350
    %v1371 = vpack.c.b16 %v1351, %v1351
    %v1372 = vpack.c.b16 %v1352, %v1352
    %v1373 = vpack.c.b16 %v1353, %v1353
    %v1374 = vpack.c.b16 %v1354, %v1354
    %v1375 = vpack.c.b16 %v1355, %v1355
    %v1376 = vpack.c.b16 %v1356, %v1356
    %v1377 = vpack.c.b16 %v1357, %v1357
    %v1378 = vpack.c.b16 %v1358, %v1358
    %1399 = vst [vmem:[#allocation9] sm:$0xf] %v1359
    %1400 = vst [vmem:[#allocation9 + $0x4] sm:$0xf] %v1360
    %1401 = vst [vmem:[#allocation9 + $0x8] sm:$0xf] %v1361
    %1402 = vst [vmem:[#allocation9 + $0xc] sm:$0xf] %v1362
    %1403 = vst [vmem:[#allocation9 + $0x10] sm:$0xf] %v1363
    %1404 = vst [vmem:[#allocation9 + $0x14] sm:$0xf] %v1364
    %1405 = vst [vmem:[#allocation9 + $0x18] sm:$0xf] %v1365
    %1406 = vst [vmem:[#allocation9 + $0x1c] sm:$0xf] %v1366
    %1407 = vst [vmem:[#allocation9 + $0x20] sm:$0xf] %v1367
    %1408 = vst [vmem:[#allocation9 + $0x24] sm:$0xf] %v1368
    %1409 = vst [vmem:[#allocation9 + $0x28] sm:$0xf] %v1369
    %1410 = vst [vmem:[#allocation9 + $0x2c] sm:$0xf] %v1370
    %1411 = vst [vmem:[#allocation9 + $0x30] sm:$0xf] %v1371
    %1412 = vst [vmem:[#allocation9 + $0x34] sm:$0xf] %v1372
    %1413 = vst [vmem:[#allocation9 + $0x38] sm:$0xf] %v1373
    %1414 = vst [vmem:[#allocation9 + $0x3c] sm:$0xf] %v1374
    %1415 = vst [vmem:[#allocation9 + $0x40] sm:$0xf] %v1375
    %1416 = vst [vmem:[#allocation9 + $0x44] sm:$0xf] %v1376
    %1417 = vst [vmem:[#allocation9 + $0x48] sm:$0xf] %v1377
    %1418 = vst [vmem:[#allocation9 + $0x4c] sm:$0xf] %v1378
    // Predicated region
    $region46: #{tpu_custom_call.1} parent=1 // pred_check
      _
    $region47: #{tpu_custom_call.1} parent=1 // pred_check_branch
      %1420 = sbr.rel (0) target = $region49
    $region48: #{tpu_custom_call.1} parent=1 // pred_region
      %s1422 = ssub.s32 2560, 2560
      %1423 = vsyncadd [#allocation4], %s1422
      %s1424 = sshll.u32 [#allocation5], 4
      %s1425 = int_to_ptr.vmem [resolvable:$true] %s1424
      %1430 = dma.vmem_to_hbm [thread:$0]  %s1425, 2560, %s10, [#allocation4], 128, 128, 8
    $region49: #{tpu_custom_call.1} parent=1 // pred_fallthru
      _
    // Predicated region
    $region50: #{tpu_custom_call.1} parent=1 // pred_check
      _
    $region51: #{tpu_custom_call.1} parent=1 // pred_check_branch
      %1432 = sbr.rel (0) target = $region53
    $region52: #{tpu_custom_call.1} parent=1 // pred_region
      %s1434 = ssub.s32 1280, 1280
      %1435 = vsyncadd [#allocation7], %s1434
      %s1436 = sshll.u32 [#allocation6], 4
      %s1437 = int_to_ptr.vmem [resolvable:$true] %s1436
      %1442 = dma.vmem_to_hbm [thread:$0]  %s1437, 1280, %s11, [#allocation7], 64, 64, 4
    $region53: #{tpu_custom_call.1} parent=1 // pred_fallthru
      _
    // Predicated region
    $region54: #{tpu_custom_call.1} parent=1 // pred_check
      _
    $region55: #{tpu_custom_call.1} parent=1 // pred_check_branch
      %1444 = sbr.rel (0) target = $region57
    $region56: #{tpu_custom_call.1} parent=1 // pred_region
      %s1446 = ssub.s32 1280, 1280
      %1447 = vsyncadd [#allocation7], %s1446
      %s1448 = sshll.u32 [#allocation8], 4
      %s1449 = int_to_ptr.vmem [resolvable:$true] %s1448
      %1454 = dma.vmem_to_hbm [thread:$0]  %s1449, 1280, %s12, [#allocation7], 64, 64, 4
    $region57: #{tpu_custom_call.1} parent=1 // pred_fallthru
      _
    // Predicated region
    $region58: #{tpu_custom_call.1} parent=1 // pred_check
      _
    $region59: #{tpu_custom_call.1} parent=1 // pred_check_branch
      %1456 = sbr.rel (0) target = $region61
    $region60: #{tpu_custom_call.1} parent=1 // pred_region
      %s1458 = ssub.s32 1280, 1280
      %1459 = vsyncadd [#allocation10], %s1458
      %s1460 = sshll.u32 [#allocation9], 4
      %s1461 = int_to_ptr.vmem [resolvable:$true] %s1460
      %1466 = dma.vmem_to_hbm [thread:$0]  %s1461, 1280, %s13, [#allocation10], 64, 64, 4
    $region61: #{tpu_custom_call.1} parent=1 // pred_fallthru
      _
    // Predicated region
    $region62: #{tpu_custom_call.1} parent=1 // pred_check
      _
    $region63: #{tpu_custom_call.1} parent=1 // pred_check_branch
      %1468 = sbr.rel (0) target = $region65
    $region64: #{tpu_custom_call.1} parent=1 // pred_region
      %1469 = dma.done [#allocation4], 2560
    $region65: #{tpu_custom_call.1} parent=1 // pred_fallthru
      _
    // Predicated region
    $region66: #{tpu_custom_call.1} parent=1 // pred_check
      _
    $region67: #{tpu_custom_call.1} parent=1 // pred_check_branch
      %1471 = sbr.rel (0) target = $region69
    $region68: #{tpu_custom_call.1} parent=1 // pred_region
      %1472 = dma.done [#allocation7], 1280
    $region69: #{tpu_custom_call.1} parent=1 // pred_fallthru
      _
    // Predicated region
    $region70: #{tpu_custom_call.1} parent=1 // pred_check
      _
    $region71: #{tpu_custom_call.1} parent=1 // pred_check_branch
      %1474 = sbr.rel (0) target = $region73
    $region72: #{tpu_custom_call.1} parent=1 // pred_region
      %1475 = dma.done [#allocation7], 1280
    $region73: #{tpu_custom_call.1} parent=1 // pred_fallthru
      _
    // Predicated region
    $region74: #{tpu_custom_call.1} parent=1 // pred_check
      _
    $region75: #{tpu_custom_call.1} parent=1 // pred_check_branch
      %1477 = sbr.rel (0) target = $region77
    $region76: #{tpu_custom_call.1} parent=1 // pred_region
      %1478 = dma.done [#allocation10], 1280
    $region77: #{tpu_custom_call.1} parent=1 // pred_fallthru
      _
    %1479 = vsyncpa [#allocation3], 1
    %1480 = vsyncpa [#allocation4], 1
    %1481 = vsyncpa [#allocation7], 1
    %1482 = vsyncpa [#allocation10], 1

</llo_original>
